<compile_context>
chip_gen: v7x
topology: tpu7x:2x2x1
jax: 0.10.0
libtpu: 0.0.40
codegen_flags: <defaults>
</compile_context>

<pallas_src>
import functools

import numpy as np
import jax
import jax.numpy as jnp
from jax.experimental import pallas as pl
from jax.experimental.pallas import tpu as pltpu


# ------------------------------ fused kernel --------------------------------

def _fused_kernel(frames_ref, melw_ref, selT_ref, selF_ref,
                  wconv_ref, bconv_ref, w1_ref, b1_ref, w2_ref, b2_ref,
                  out_ref):
    # frames_ref: (Bt, F, WIN)  VMEM        melw_ref: (WIN, M)       VMEM
    # selT_ref:  (3*Mo, M)      VMEM        selF_ref: (3, F, Fo)     VMEM
    # wconv_ref: (9, C)         SMEM        bconv_ref: (1, C)        SMEM
    # w1_ref: (C, H)  b1_ref: (1, H)        w2_ref: (H, N)  b2_ref: (1, N)
    # out_ref: (Bt, 1, PACK) packed row = [mel_avg | clf1 | clf2(pooled) | logits | 0...]
    Bt, F, _WIN = frames_ref.shape
    M = melw_ref.shape[1]
    Mo = selT_ref.shape[0] // 3
    Fo = selF_ref.shape[2]
    C = wconv_ref.shape[1]
    H = w1_ref.shape[1]
    N = w2_ref.shape[1]
    PACK = out_ref.shape[2]

    melw = melw_ref[...]                                   # hoisted, loop invariant
    selT = selT_ref[...]
    selF = [selF_ref[di] for di in range(3)]               # 3 x (F, Fo)
    lane_c = jax.lax.broadcasted_iota(jnp.int32, (1, C), 1)
    inv_pool = 1.0 / float(Fo * Mo)

    mel_rows = []
    pooled_rows = []
    for s in range(Bt):                                    # Bt is small and static
        # --- mel spectrogram (lane-dense (F, M), never leaves registers/VMEM) ---
        fr = frames_ref[s]                                 # (F, WIN)
        power = fr * fr
        logmel = jnp.log(
            jnp.dot(power, melw, preferred_element_type=jnp.float32) + 1e-5)   # (F, M)
        mel_rows.append(jnp.mean(logmel, axis=0, keepdims=True))               # (1, M)

        # --- conv stem gathers (stride 2, pad 1) as MXU selection matmuls ---
        # mel-axis gather, consuming logmel transposed directly (no XLU transpose):
        #   Gt[dj*Mo + mo, f] = logmel[f, 2*mo - 1 + dj]   (0 where out of range)
        Gt = jax.lax.dot_general(
            selT, logmel,
            dimension_numbers=(((1,), (1,)), ((), ())),
            preferred_element_type=jnp.float32)            # (3*Mo, F)
        # frame-axis gather, one matmul per di so the nine tap tiles are
        # sublane-aligned, full-lane-width slices:
        #   Xb[di][dj][mo, fo] = logmel[2*fo - 1 + di, 2*mo - 1 + dj]
        Xb = []
        for di in range(3):
            Xd = jnp.dot(Gt, selF[di], preferred_element_type=jnp.float32)     # (3*Mo, Fo)
            Xb.append([Xd[dj * Mo:(dj + 1) * Mo, :] for dj in range(3)])       # 3 x (Mo, Fo)

        # --- 3x3 conv + ReLU + global average pool ---
        # One lane-dense (Mo, Fo) accumulator per channel; tap weights are
        # scalar splats read from SMEM (no per-iteration broadcasts), channels
        # iterated with fori_loop (bounded live ranges, no giant unroll).
        def chan_body(c, pooled_row):
            acc = Xb[0][0] * wconv_ref[0, c]
            for di in range(3):
                for dj in range(3):
                    if di == 0 and dj == 0:
                        continue
                    acc = acc + Xb[di][dj] * wconv_ref[di * 3 + dj, c]
            s_c = jnp.sum(jnp.maximum(acc + bconv_ref[0, c], 0.0)) * inv_pool
            return jnp.where(lane_c == c, s_c, pooled_row)

        pooled_rows.append(
            jax.lax.fori_loop(0, C, chan_body, jnp.zeros((1, C), jnp.float32)))

    mel_all = jnp.concatenate(mel_rows, axis=0)            # (Bt, M)
    pooled_all = jnp.concatenate(pooled_rows, axis=0)      # (Bt, C)

    # --- batched classifier head: (Bt,C)@(C,H) and (Bt,H)@(H,N) ---
    clf1 = jnp.maximum(
        jnp.dot(pooled_all, w1_ref[...], preferred_element_type=jnp.float32)
        + b1_ref[...], 0.0)                                # (Bt, H)
    logits = jnp.dot(clf1, w2_ref[...],
                     preferred_element_type=jnp.float32) + b2_ref[...]          # (Bt, N)

    # --- packed, lane-dense output: one full-width store per sample ---
    pad = jnp.zeros((Bt, PACK - (M + H + C + N)), jnp.float32)
    packed = jnp.concatenate([mel_all, clf1, pooled_all, logits, pad], axis=1)   # (Bt, PACK)
    for s in range(Bt):
        out_ref[s] = packed[s:s + 1, :]


def _choose_block_batch(B, F, win):
    """Samples per grid step.

    The frames block is Bt*F*win*4 bytes and is double-buffered by the
    pipeline; keep it under ~4 MiB per buffer so the kernel fits v5e's 16 MiB
    scoped-VMEM default (v6e: 32/128 MiB, v7x: 32/64 MiB) without flags.
    Also keep >= 2 grid steps when B allows it so both v7x TensorCores work.
    """
    bytes_per_sample = max(1, F * win * 4)
    cap = max(1, (4 * 1024 * 1024) // bytes_per_sample)
    bt = max(1, min(8, B, cap))
    while bt > 1 and -(-B // bt) < 2:
        bt -= 1
    return bt


def fused_forward(frames, mel_w, selT, selF, wconv, bconv, w1, b1, w2, b2,
                  pack, bt):
    """frames: (B, F, WIN) -> packed features (B, pack)."""
    B, F, WIN = frames.shape
    n_steps = -(-B // bt)
    B_pad = n_steps * bt
    if B_pad != B:   # zero-pad batch to a multiple of bt (padded rows discarded)
        frames = jnp.concatenate(
            [frames, jnp.zeros((B_pad - B, F, WIN), frames.dtype)], axis=0)

    def full2(shape):
        return pl.BlockSpec(shape, lambda b: (0, 0))

    packed = pl.pallas_call(
        _fused_kernel,
        out_shape=jax.ShapeDtypeStruct((B_pad, 1, pack), jnp.float32),
        grid=(n_steps,),
        in_specs=[
            pl.BlockSpec((bt, F, WIN), lambda b: (b, 0, 0)),           # frames
            full2(mel_w.shape),                                        # mel filterbank
            full2(selT.shape),                                         # mel-axis gather
            pl.BlockSpec(selF.shape, lambda b: (0, 0, 0)),             # frame-axis gather
            pl.BlockSpec(memory_space=pltpu.MemorySpace.SMEM),         # conv weights (scalar reads)
            pl.BlockSpec(memory_space=pltpu.MemorySpace.SMEM),         # conv bias
            full2(w1.shape),
            full2(b1.shape),
            full2(w2.shape),
            full2(b2.shape),
        ],
        out_specs=pl.BlockSpec((bt, 1, pack), lambda b: (b, 0, 0)),
        compiler_params=pltpu.CompilerParams(
            dimension_semantics=("parallel",)),
    )(frames, mel_w, selT, selF, wconv, bconv, w1, b1, w2, b2)
    return packed[:B, 0, :]


# --------------------------- HEAR wrapper (JAX) ------------------------------

class MNHearWrapperPallas:
    """Synthetic Pallas re-implementation of MNHearWrapper.forward."""

    # model geometry (small, deterministic)
    WIN = 128       # frame length (mel "fft" window)
    HOP = 128       # frame hop (== WIN, no overlap)
    N_MELS = 64
    CONV_C = 32     # conv stem channels
    HIDDEN = 48     # classifier hidden size -> clf1 feature dim
    N_CLASSES = 10
    PACK = 256      # packed (lane-dense) kernel output width

    _SUPPORTED_MODES = ('mel_avgs', 'clf1', 'clf2', 'logits')

    def __init__(self, mode=('clf1',), sample_rate=16000,
                 max_model_window=10000, timestamp_window=160,
                 timestamp_hop=50, scene_hop=2500):
        bad = [m for m in mode if m not in self._SUPPORTED_MODES]
        if bad:
            # TODO(synk): se_features / block_features modes need the full
            # MobileNet backbone (SE blocks, 15 inverted-residual blocks).
            raise NotImplementedError(f"unsupported mode entries: {bad}")
        self.mode = mode
        self.sample_rate = sample_rate
        self.timestamp_window = int(timestamp_window * sample_rate / 1000)
        self.max_model_window = int(max_model_window * sample_rate / 1000)
        self.timestamp_hop = int(timestamp_hop * sample_rate / 1000)
        self.scene_hop = int(scene_hop * sample_rate / 1000)

        M, C, H, N = self.N_MELS, self.CONV_C, self.HIDDEN, self.N_CLASSES
        assert self.PACK >= M + H + C + N

        key = jax.random.PRNGKey(42)
        k_mel, k_wc, k_bc, k_w1, k_b1, k_w2, k_b2 = jax.random.split(key, 7)
        # non-negative mel filterbank (WIN, N_MELS)
        # TODO(synk): the real `mel` module is an STFT-based AugmentMelSTFT;
        # this is a synthetic stand-in (power frames @ random filterbank + log).
        self.mel_w = jnp.abs(
            jax.random.normal(k_mel, (self.WIN, M), jnp.float32)) * 0.05
        # 3x3 conv stem weights, row j = kernel tap (di, dj) over the spec image
        self.wconv = jax.random.normal(k_wc, (9, C), jnp.float32) * 0.1
        self.bconv = jax.random.normal(k_bc, (1, C), jnp.float32) * 0.01
        # classifier
        self.w1 = jax.random.normal(k_w1, (C, H), jnp.float32) * 0.1
        self.b1 = jax.random.normal(k_b1, (1, H), jnp.float32) * 0.01
        self.w2 = jax.random.normal(k_w2, (H, N), jnp.float32) * 0.1
        self.b2 = jax.random.normal(k_b2, (1, N), jnp.float32) * 0.01

        # constant 0/1 selection matrix: stride-2, pad-1 gather along mels
        Mo = (M + 1) // 2
        selT = np.zeros((3 * Mo, M), np.float32)
        for dj in range(3):
            for mo in range(Mo):
                m = 2 * mo - 1 + dj
                if 0 <= m < M:
                    selT[dj * Mo + mo, m] = 1.0
        self.selT = jnp.asarray(selT)

    def _make_selF(self, F):
        """Constant 0/1 selection: stride-2, pad-1 gather along conv frames."""
        Fo = (F + 1) // 2
        selF = np.zeros((3, F, Fo), np.float32)
        for di in range(3):
            for fo in range(Fo):
                f = 2 * fo - 1 + di
                if 0 <= f < F:
                    selF[di, f, fo] = 1.0
        return jnp.asarray(selF)

    @functools.partial(jax.jit, static_argnums=0)
    def forward(self, audio):
        """audio: (B, n_samples) float32 in [-1, 1] -> embed (B, E)."""
        B, n = audio.shape
        if n < self.WIN:                 # guard: shorter than one hop
            audio = jnp.pad(audio, ((0, 0), (0, self.WIN - n)))
            n = self.WIN
        F = n // self.HOP
        frames = audio[:, :F * self.HOP].reshape(B, F, self.WIN)

        selF = self._make_selF(F)
        bt = _choose_block_batch(B, F, self.WIN)

        packed = fused_forward(frames, self.mel_w, self.selT, selF,
                               self.wconv, self.bconv,
                               self.w1, self.b1, self.w2, self.b2,
                               self.PACK, bt)               # (B, PACK)

        M, H, C, N = self.N_MELS, self.HIDDEN, self.CONV_C, self.N_CLASSES
        mel_avgs = packed[:, 0:M]
        clf1 = packed[:, M:M + H]
        clf2 = packed[:, M + H:M + H + C]
        logits = packed[:, M + H + C:M + H + C + N]

        # --- embedding assembly per `mode` (matches torch.cat logic) ---
        parts = []
        if 'mel_avgs' in self.mode:
            parts.append(mel_avgs.reshape(B, -1))
        if 'clf1' in self.mode:
            parts.append(clf1)
        if 'clf2' in self.mode:
            parts.append(clf2)
        if 'logits' in self.mode:
            parts.append(logits)
        if not parts:
            return jnp.zeros((B, 0), jnp.float32)
        return jnp.concatenate(parts, axis=1)


if __name__ == "__main__":
    B, N_SAMPLES = 2, 1024
    key = jax.random.PRNGKey(0)
    audio = jax.random.uniform(
        key, (B, N_SAMPLES), jnp.float32, minval=-1.0, maxval=1.0)

    # default mode ('clf1',)
    model = MNHearWrapperPallas(mode=('clf1',))
    embed = model.forward(audio)
    jax.block_until_ready(embed)
    assert embed.shape == (B, MNHearWrapperPallas.HIDDEN), embed.shape
    assert embed.dtype == jnp.float32

    # all supported modes at once (exercises every packed slice)
    model_full = MNHearWrapperPallas(
        mode=('mel_avgs', 'clf1', 'clf2', 'logits'))
    embed_full = model_full.forward(audio)
    jax.block_until_ready(embed_full)
    M = MNHearWrapperPallas.N_MELS
    H = MNHearWrapperPallas.HIDDEN
    C = MNHearWrapperPallas.CONV_C
    N = MNHearWrapperPallas.N_CLASSES
    assert embed_full.shape == (B, M + H + C + N), embed_full.shape
    # the clf1 slice of the full-mode embedding must match the clf1-only embedding
    assert bool(jnp.allclose(embed_full[:, M:M + H], embed, atol=1e-5))

    print("KERNEL_OK")
</pallas_src>

<mosaic_0001>
module attributes {stable_mosaic.version = 11 : i64} {
  func.func @_fused_kernel(%arg0: i32, %arg1: memref<1x8x128xf32, #tpu.memory_space<vmem>>, %arg2: memref<128x64xf32, #tpu.memory_space<vmem>>, %arg3: memref<96x64xf32, #tpu.memory_space<vmem>>, %arg4: memref<3x8x4xf32, #tpu.memory_space<vmem>>, %arg5: memref<9x32xf32, #tpu.memory_space<smem>>, %arg6: memref<1x32xf32, #tpu.memory_space<smem>>, %arg7: memref<32x48xf32, #tpu.memory_space<vmem>>, %arg8: memref<1x48xf32, #tpu.memory_space<vmem>>, %arg9: memref<48x10xf32, #tpu.memory_space<vmem>>, %arg10: memref<1x10xf32, #tpu.memory_space<vmem>>, %arg11: memref<1x1x256xf32, #tpu.memory_space<vmem>>) attributes {dimension_semantics = [#tpu.dimension_semantics<parallel>], iteration_bounds = array<i64: 2>, scalar_prefetch = 0 : i64, scratch_operands = 0 : i64, tpu.core_type = #tpu.core_type<tc>, window_params = [{transform_indices = @transform_0, window_bounds = array<i64: 1, 8, 128>}, {pipeline_mode = #tpu.pipeline_mode<synchronous>, transform_indices = @transform_1, window_bounds = array<i64: 128, 64>}, {pipeline_mode = #tpu.pipeline_mode<synchronous>, transform_indices = @transform_2, window_bounds = array<i64: 96, 64>}, {pipeline_mode = #tpu.pipeline_mode<synchronous>, transform_indices = @transform_3, window_bounds = array<i64: 3, 8, 4>}, {transform_indices = @transform_4, window_bounds = array<i64: 9, 32>}, {transform_indices = @transform_5, window_bounds = array<i64: 1, 32>}, {pipeline_mode = #tpu.pipeline_mode<synchronous>, transform_indices = @transform_6, window_bounds = array<i64: 32, 48>}, {pipeline_mode = #tpu.pipeline_mode<synchronous>, transform_indices = @transform_7, window_bounds = array<i64: 1, 48>}, {pipeline_mode = #tpu.pipeline_mode<synchronous>, transform_indices = @transform_8, window_bounds = array<i64: 48, 10>}, {pipeline_mode = #tpu.pipeline_mode<synchronous>, transform_indices = @transform_9, window_bounds = array<i64: 1, 10>}, {transform_indices = @transform_10, window_bounds = array<i64: 1, 1, 256>}]} {
    %c0 = arith.constant 0 : index
    %c0_0 = arith.constant 0 : index
    %0 = vector.load %arg2[%c0, %c0_0] : memref<128x64xf32, #tpu.memory_space<vmem>>, vector<128x64xf32>
    %c0_1 = arith.constant 0 : index
    %c0_2 = arith.constant 0 : index
    %1 = vector.load %arg3[%c0_1, %c0_2] : memref<96x64xf32, #tpu.memory_space<vmem>>, vector<96x64xf32>
    %c0_3 = arith.constant 0 : index
    %c0_4 = arith.constant 0 : index
    %c0_5 = arith.constant 0 : index
    %2 = vector.load %arg4[%c0_3, %c0_4, %c0_5] : memref<3x8x4xf32, #tpu.memory_space<vmem>>, vector<1x8x4xf32>
    %3 = vector.shape_cast %2 : vector<1x8x4xf32> to vector<8x4xf32>
    %c1 = arith.constant 1 : index
    %c0_6 = arith.constant 0 : index
    %c0_7 = arith.constant 0 : index
    %4 = vector.load %arg4[%c1, %c0_6, %c0_7] : memref<3x8x4xf32, #tpu.memory_space<vmem>>, vector<1x8x4xf32>
    %5 = vector.shape_cast %4 : vector<1x8x4xf32> to vector<8x4xf32>
    %c2 = arith.constant 2 : index
    %c0_8 = arith.constant 0 : index
    %c0_9 = arith.constant 0 : index
    %6 = vector.load %arg4[%c2, %c0_8, %c0_9] : memref<3x8x4xf32, #tpu.memory_space<vmem>>, vector<1x8x4xf32>
    %7 = vector.shape_cast %6 : vector<1x8x4xf32> to vector<8x4xf32>
    %8 = tpu.iota {dimensions = array<i32: 1>} : vector<1x32xi32>
    %c0_10 = arith.constant 0 : index
    %c0_11 = arith.constant 0 : index
    %c0_12 = arith.constant 0 : index
    %9 = vector.load %arg1[%c0_10, %c0_11, %c0_12] : memref<1x8x128xf32, #tpu.memory_space<vmem>>, vector<1x8x128xf32>
    %10 = vector.shape_cast %9 : vector<1x8x128xf32> to vector<8x128xf32>
    %11 = arith.mulf %10, %10 : vector<8x128xf32>
    %cst = arith.constant dense<0.000000e+00> : vector<8x64xf32>
    %12 = tpu.matmul %11, %0, %cst {dimension_numbers = #tpu.dot_dimension_numbers<[1], [0], [0], [1], [0, 0, 1, 1], [], []>} : vector<8x128xf32>, vector<128x64xf32>, vector<8x64xf32> -> vector<8x64xf32>
    %cst_13 = arith.constant 9.99999974E-6 : f32
    %13 = vector.broadcast %cst_13 : f32 to vector<8x64xf32>
    %14 = arith.addf %12, %13 : vector<8x64xf32>
    %15 = math.log %14 : vector<8x64xf32>
    %cst_14 = arith.constant dense<0.000000e+00> : vector<64xf32>
    %16 = vector.multi_reduction <add>, %15, %cst_14 [0] : vector<8x64xf32> to vector<64xf32>
    %17 = vector.shape_cast %16 : vector<64xf32> to vector<1x64xf32>
    %cst_15 = arith.constant 8.000000e+00 : f32
    %18 = vector.broadcast %cst_15 : f32 to vector<1x64xf32>
    %19 = arith.divf %17, %18 : vector<1x64xf32>
    %cst_16 = arith.constant dense<0.000000e+00> : vector<96x8xf32>
    %20 = tpu.matmul %1, %15, %cst_16 {dimension_numbers = #tpu.dot_dimension_numbers<[1], [1], [0], [0], [0, 0, 1, 0], [], []>} : vector<96x64xf32>, vector<8x64xf32>, vector<96x8xf32> -> vector<96x8xf32>
    %cst_17 = arith.constant dense<0.000000e+00> : vector<96x4xf32>
    %21 = tpu.matmul %20, %3, %cst_17 {dimension_numbers = #tpu.dot_dimension_numbers<[1], [0], [0], [1], [0, 0, 1, 1], [], []>} : vector<96x8xf32>, vector<8x4xf32>, vector<96x4xf32> -> vector<96x4xf32>
    %22 = vector.extract_strided_slice %21 {offsets = [0, 0], sizes = [32, 4], strides = [1, 1]} : vector<96x4xf32> to vector<32x4xf32>
    %23 = vector.extract_strided_slice %21 {offsets = [32, 0], sizes = [32, 4], strides = [1, 1]} : vector<96x4xf32> to vector<32x4xf32>
    %24 = vector.extract_strided_slice %21 {offsets = [64, 0], sizes = [32, 4], strides = [1, 1]} : vector<96x4xf32> to vector<32x4xf32>
    %cst_18 = arith.constant dense<0.000000e+00> : vector<96x4xf32>
    %25 = tpu.matmul %20, %5, %cst_18 {dimension_numbers = #tpu.dot_dimension_numbers<[1], [0], [0], [1], [0, 0, 1, 1], [], []>} : vector<96x8xf32>, vector<8x4xf32>, vector<96x4xf32> -> vector<96x4xf32>
    %26 = vector.extract_strided_slice %25 {offsets = [0, 0], sizes = [32, 4], strides = [1, 1]} : vector<96x4xf32> to vector<32x4xf32>
    %27 = vector.extract_strided_slice %25 {offsets = [32, 0], sizes = [32, 4], strides = [1, 1]} : vector<96x4xf32> to vector<32x4xf32>
    %28 = vector.extract_strided_slice %25 {offsets = [64, 0], sizes = [32, 4], strides = [1, 1]} : vector<96x4xf32> to vector<32x4xf32>
    %cst_19 = arith.constant dense<0.000000e+00> : vector<96x4xf32>
    %29 = tpu.matmul %20, %7, %cst_19 {dimension_numbers = #tpu.dot_dimension_numbers<[1], [0], [0], [1], [0, 0, 1, 1], [], []>} : vector<96x8xf32>, vector<8x4xf32>, vector<96x4xf32> -> vector<96x4xf32>
    %30 = vector.extract_strided_slice %29 {offsets = [0, 0], sizes = [32, 4], strides = [1, 1]} : vector<96x4xf32> to vector<32x4xf32>
    %31 = vector.extract_strided_slice %29 {offsets = [32, 0], sizes = [32, 4], strides = [1, 1]} : vector<96x4xf32> to vector<32x4xf32>
    %32 = vector.extract_strided_slice %29 {offsets = [64, 0], sizes = [32, 4], strides = [1, 1]} : vector<96x4xf32> to vector<32x4xf32>
    %cst_20 = arith.constant 0.000000e+00 : f32
    %33 = vector.broadcast %cst_20 : f32 to vector<1x32xf32>
    %c0_i32 = arith.constant 0 : i32
    %c32_i32 = arith.constant 32 : i32
    %34 = arith.addi %c0_i32, %c32_i32 : i32
    %c1_i32 = arith.constant 1 : i32
    %35 = scf.for %arg12 = %c0_i32 to %34 step %c1_i32 iter_args(%arg13 = %33) -> (vector<1x32xf32>)  : i32 {
      %c0_37 = arith.constant 0 : index
      %51 = arith.index_cast %arg12 : i32 to index
      %52 = memref.load %arg5[%c0_37, %51] : memref<9x32xf32, #tpu.memory_space<smem>>
      %53 = vector.broadcast %52 : f32 to vector<32x4xf32>
      %54 = arith.mulf %22, %53 : vector<32x4xf32>
      %c1_38 = arith.constant 1 : index
      %55 = arith.index_cast %arg12 : i32 to index
      %56 = memref.load %arg5[%c1_38, %55] : memref<9x32xf32, #tpu.memory_space<smem>>
      %57 = vector.broadcast %56 : f32 to vector<32x4xf32>
      %58 = arith.mulf %23, %57 : vector<32x4xf32>
      %59 = arith.addf %54, %58 : vector<32x4xf32>
      %c2_39 = arith.constant 2 : index
      %60 = arith.index_cast %arg12 : i32 to index
      %61 = memref.load %arg5[%c2_39, %60] : memref<9x32xf32, #tpu.memory_space<smem>>
      %62 = vector.broadcast %61 : f32 to vector<32x4xf32>
      %63 = arith.mulf %24, %62 : vector<32x4xf32>
      %64 = arith.addf %59, %63 : vector<32x4xf32>
      %c3 = arith.constant 3 : index
      %65 = arith.index_cast %arg12 : i32 to index
      %66 = memref.load %arg5[%c3, %65] : memref<9x32xf32, #tpu.memory_space<smem>>
      %67 = vector.broadcast %66 : f32 to vector<32x4xf32>
      %68 = arith.mulf %26, %67 : vector<32x4xf32>
      %69 = arith.addf %64, %68 : vector<32x4xf32>
      %c4 = arith.constant 4 : index
      %70 = arith.index_cast %arg12 : i32 to index
      %71 = memref.load %arg5[%c4, %70] : memref<9x32xf32, #tpu.memory_space<smem>>
      %72 = vector.broadcast %71 : f32 to vector<32x4xf32>
      %73 = arith.mulf %27, %72 : vector<32x4xf32>
      %74 = arith.addf %69, %73 : vector<32x4xf32>
      %c5 = arith.constant 5 : index
      %75 = arith.index_cast %arg12 : i32 to index
      %76 = memref.load %arg5[%c5, %75] : memref<9x32xf32, #tpu.memory_space<smem>>
      %77 = vector.broadcast %76 : f32 to vector<32x4xf32>
      %78 = arith.mulf %28, %77 : vector<32x4xf32>
      %79 = arith.addf %74, %78 : vector<32x4xf32>
      %c6 = arith.constant 6 : index
      %80 = arith.index_cast %arg12 : i32 to index
      %81 = memref.load %arg5[%c6, %80] : memref<9x32xf32, #tpu.memory_space<smem>>
      %82 = vector.broadcast %81 : f32 to vector<32x4xf32>
      %83 = arith.mulf %30, %82 : vector<32x4xf32>
      %84 = arith.addf %79, %83 : vector<32x4xf32>
      %c7 = arith.constant 7 : index
      %85 = arith.index_cast %arg12 : i32 to index
      %86 = memref.load %arg5[%c7, %85] : memref<9x32xf32, #tpu.memory_space<smem>>
      %87 = vector.broadcast %86 : f32 to vector<32x4xf32>
      %88 = arith.mulf %31, %87 : vector<32x4xf32>
      %89 = arith.addf %84, %88 : vector<32x4xf32>
      %c8 = arith.constant 8 : index
      %90 = arith.index_cast %arg12 : i32 to index
      %91 = memref.load %arg5[%c8, %90] : memref<9x32xf32, #tpu.memory_space<smem>>
      %92 = vector.broadcast %91 : f32 to vector<32x4xf32>
      %93 = arith.mulf %32, %92 : vector<32x4xf32>
      %94 = arith.addf %89, %93 : vector<32x4xf32>
      %c0_40 = arith.constant 0 : index
      %95 = arith.index_cast %arg12 : i32 to index
      %96 = memref.load %arg6[%c0_40, %95] : memref<1x32xf32, #tpu.memory_space<smem>>
      %97 = vector.broadcast %96 : f32 to vector<32x4xf32>
      %98 = arith.addf %94, %97 : vector<32x4xf32>
      %cst_41 = arith.constant 0.000000e+00 : f32
      %99 = vector.broadcast %cst_41 : f32 to vector<32x4xf32>
      %100 = arith.maximumf %98, %99 : vector<32x4xf32>
      %101 = vector.shape_cast %100 : vector<32x4xf32> to vector<1x32x4xf32>
      %cst_42 = arith.constant dense<0.000000e+00> : vector<1xf32>
      %102 = vector.multi_reduction <add>, %101, %cst_42 [1, 2] : vector<1x32x4xf32> to vector<1xf32>
      %103 = vector.shape_cast %102 : vector<1xf32> to vector<1x1x1xf32>
      %104 = vector.extract %103[0, 0, 0] : f32 from vector<1x1x1xf32>
      %cst_43 = arith.constant 7.812500e-03 : f32
      %105 = arith.mulf %104, %cst_43 : f32
      %106 = vector.broadcast %arg12 : i32 to vector<1x32xi32>
      %107 = arith.cmpi eq, %8, %106 : vector<1x32xi32>
      %108 = vector.broadcast %105 : f32 to vector<1x32xf32>
      %109 = arith.select %107, %108, %arg13 : vector<1x32xi1>, vector<1x32xf32>
      scf.yield %109 : vector<1x32xf32>
    }
    %c32_i32_21 = arith.constant 32 : i32
    %c0_22 = arith.constant 0 : index
    %c0_23 = arith.constant 0 : index
    %36 = vector.load %arg7[%c0_22, %c0_23] : memref<32x48xf32, #tpu.memory_space<vmem>>, vector<32x48xf32>
    %cst_24 = arith.constant dense<0.000000e+00> : vector<1x48xf32>
    %37 = tpu.matmul %35, %36, %cst_24 {dimension_numbers = #tpu.dot_dimension_numbers<[1], [0], [0], [1], [0, 0, 1, 1], [], []>} : vector<1x32xf32>, vector<32x48xf32>, vector<1x48xf32> -> vector<1x48xf32>
    %c0_25 = arith.constant 0 : index
    %c0_26 = arith.constant 0 : index
    %38 = vector.load %arg8[%c0_25, %c0_26] : memref<1x48xf32, #tpu.memory_space<vmem>>, vector<1x48xf32>
    %39 = arith.addf %37, %38 : vector<1x48xf32>
    %cst_27 = arith.constant 0.000000e+00 : f32
    %40 = vector.broadcast %cst_27 : f32 to vector<1x48xf32>
    %41 = arith.maximumf %39, %40 : vector<1x48xf32>
    %c0_28 = arith.constant 0 : index
    %c0_29 = arith.constant 0 : index
    %42 = vector.load %arg9[%c0_28, %c0_29] : memref<48x10xf32, #tpu.memory_space<vmem>>, vector<48x10xf32>
    %cst_30 = arith.constant dense<0.000000e+00> : vector<1x10xf32>
    %43 = tpu.matmul %41, %42, %cst_30 {dimension_numbers = #tpu.dot_dimension_numbers<[1], [0], [0], [1], [0, 0, 1, 1], [], []>} : vector<1x48xf32>, vector<48x10xf32>, vector<1x10xf32> -> vector<1x10xf32>
    %c0_31 = arith.constant 0 : index
    %c0_32 = arith.constant 0 : index
    %44 = vector.load %arg10[%c0_31, %c0_32] : memref<1x10xf32, #tpu.memory_space<vmem>>, vector<1x10xf32>
    %45 = arith.addf %43, %44 : vector<1x10xf32>
    %cst_33 = arith.constant 0.000000e+00 : f32
    %46 = vector.broadcast %cst_33 : f32 to vector<1x102xf32>
    %47 = tpu.concatenate %19, %41, %35, %45, %46 in 1 : vector<1x64xf32>, vector<1x48xf32>, vector<1x32xf32>, vector<1x10xf32>, vector<1x102xf32> -> vector<1x256xf32>
    %c0_34 = arith.constant 0 : index
    %c0_35 = arith.constant 0 : index
    %c0_36 = arith.constant 0 : index
    %48 = vector.load %arg11[%c0_34, %c0_35, %c0_36] : memref<1x1x256xf32, #tpu.memory_space<vmem>>, vector<1x1x256xf32>
    %49 = vector.shape_cast %48 : vector<1x1x256xf32> to vector<1x256xf32>
    %50 = vector.shape_cast %47 : vector<1x256xf32> to vector<1x1x256xf32>
    tpu.vector_store %arg11[%c0_34, %c0_35, %c0_36], %50 {strides = array<i32>} : memref<1x1x256xf32, #tpu.memory_space<vmem>>, vector<1x1x256xf32>,
    return
  }
  func.func @transform_0(%arg0: i32) -> (i32, i32, i32) {
    %c0_i32 = arith.constant 0 : i32
    %c0_i32_0 = arith.constant 0 : i32
    %c0_i32_1 = arith.constant 0 : i32
    return %arg0, %c0_i32, %c0_i32_0 : i32, i32, i32
  }
  func.func @transform_1(%arg0: i32) -> (i32, i32) {
    %c0_i32 = arith.constant 0 : i32
    %c0_i32_0 = arith.constant 0 : i32
    %c0_i32_1 = arith.constant 0 : i32
    return %c0_i32, %c0_i32_0 : i32, i32
  }
  func.func @transform_2(%arg0: i32) -> (i32, i32) {
    %c0_i32 = arith.constant 0 : i32
    %c0_i32_0 = arith.constant 0 : i32
    %c0_i32_1 = arith.constant 0 : i32
    return %c0_i32, %c0_i32_0 : i32, i32
  }
  func.func @transform_3(%arg0: i32) -> (i32, i32, i32) {
    %c0_i32 = arith.constant 0 : i32
    %c0_i32_0 = arith.constant 0 : i32
    %c0_i32_1 = arith.constant 0 : i32
    %c0_i32_2 = arith.constant 0 : i32
    return %c0_i32, %c0_i32_0, %c0_i32_1 : i32, i32, i32
  }
  func.func @transform_4(%arg0: i32) -> (i32, i32) {
    %c0_i32 = arith.constant 0 : i32
    %c0_i32_0 = arith.constant 0 : i32
    %c0_i32_1 = arith.constant 0 : i32
    return %c0_i32, %c0_i32_0 : i32, i32
  }
  func.func @transform_5(%arg0: i32) -> (i32, i32) {
    %c0_i32 = arith.constant 0 : i32
    %c0_i32_0 = arith.constant 0 : i32
    %c0_i32_1 = arith.constant 0 : i32
    return %c0_i32, %c0_i32_0 : i32, i32
  }
  func.func @transform_6(%arg0: i32) -> (i32, i32) {
    %c0_i32 = arith.constant 0 : i32
    %c0_i32_0 = arith.constant 0 : i32
    %c0_i32_1 = arith.constant 0 : i32
    return %c0_i32, %c0_i32_0 : i32, i32
  }
  func.func @transform_7(%arg0: i32) -> (i32, i32) {
    %c0_i32 = arith.constant 0 : i32
    %c0_i32_0 = arith.constant 0 : i32
    %c0_i32_1 = arith.constant 0 : i32
    return %c0_i32, %c0_i32_0 : i32, i32
  }
  func.func @transform_8(%arg0: i32) -> (i32, i32) {
    %c0_i32 = arith.constant 0 : i32
    %c0_i32_0 = arith.constant 0 : i32
    %c0_i32_1 = arith.constant 0 : i32
    return %c0_i32, %c0_i32_0 : i32, i32
  }
  func.func @transform_9(%arg0: i32) -> (i32, i32) {
    %c0_i32 = arith.constant 0 : i32
    %c0_i32_0 = arith.constant 0 : i32
    %c0_i32_1 = arith.constant 0 : i32
    return %c0_i32, %c0_i32_0 : i32, i32
  }
  func.func @transform_10(%arg0: i32) -> (i32, i32, i32) {
    %c0_i32 = arith.constant 0 : i32
    %c0_i32_0 = arith.constant 0 : i32
    %c0_i32_1 = arith.constant 0 : i32
    return %arg0, %c0_i32, %c0_i32_0 : i32, i32, i32
  }
}

</mosaic_0001>

<llo_original>
// kernel: forward.1
$region0: #{forward.1}
  #allocation0 [shape = 'u32[]', space=smem, size = 0x4, offset = 0x4, fixed_abs, tag = 'smem constant byte address 0x4 - core index']
  #allocation1 [shape = 'u32[144,128]{1,0:T(1,128)}', space=vmem, size = 0x12000, scoped, tag = 'internal scratch']
  %s0 = inlined_call_operand.vmem [shape: f32[2,8,128], index: 0, kind: input, shape index: {}]
  %s1 = inlined_call_operand.hbm [shape: f32[128,64], index: 1, kind: input, shape index: {}]
  %s2 = inlined_call_operand.hbm [shape: f32[96,64], index: 2, kind: input, shape index: {}]
  %s3 = inlined_call_operand.hbm [shape: f32[3,8,4], index: 3, kind: input, shape index: {}]
  %s4 = inlined_call_operand.vmem [shape: f32[9,32], index: 4, kind: input, shape index: {}]
  %s5 = inlined_call_operand.hbm [shape: f32[1,32], index: 5, kind: input, shape index: {}]
  %s6 = inlined_call_operand.hbm [shape: f32[32,48], index: 6, kind: input, shape index: {}]
  %s7 = inlined_call_operand.vmem [shape: f32[1,48], index: 7, kind: input, shape index: {}]
  %s8 = inlined_call_operand.vmem [shape: f32[48,10], index: 8, kind: input, shape index: {}]
  %s9 = inlined_call_operand.vmem [shape: f32[1,10], index: 9, kind: input, shape index: {}]
  %s10 = inlined_call_operand.vmem [shape: f32[2,1,256], index: 10, kind: output, shape index: {}]
  %s11 = sld [smem:[#allocation0]]
  $region104: #{forward.1} parent=0
    _
  %s13 = ssub.s32 1, %s11
  %s14 = scalar_select 0, %s13, %s11
  $region1: #{forward.1} parent=0
    #allocation2 [shape = 'u8[65536]{0}', space=vmem, size = 0x10000, scoped, tag = 'input window, operand 1, single buffered']
    #allocation3 [shape = 's32[2]{0}', space=sflag, size = 0x8, scoped, tag = 'scoped memory for forward.1']
    #allocation4 [shape = 's32[2]{0}', space=sflag, size = 0x8, scoped, tag = 'scoped memory for forward.1']
    #allocation5 [shape = 's32[2]{0}', space=sflag, size = 0x8, scoped, tag = 'scoped memory for forward.1']
    #allocation6 [shape = 'u8[49152]{0}', space=vmem, size = 0xc000, scoped, tag = 'input window, operand 2, single buffered']
    #allocation7 [shape = 's32[1]{0}', space=sflag, size = 0x4, scoped, tag = 'scoped memory for forward.1']
    #allocation8 [shape = 'u8[12288]{0}', space=vmem, size = 0x3000, scoped, tag = 'input window, operand 3, single buffered']
    #allocation9 [shape = 'u8[8192]{0}', space=smem, size = 0x2000, scoped, tag = 'input window, operand 4, single buffered']
    #allocation10 [shape = 'u8[512]{0}', space=smem, size = 0x200, scoped, tag = 'input window, operand 5, single buffered']
    #allocation11 [shape = 'u8[16384]{0}', space=vmem, size = 0x4000, scoped, tag = 'input window, operand 6, single buffered']
    #allocation12 [shape = 's32[1]{0}', space=sflag, size = 0x4, scoped, tag = 'scoped memory for forward.1']
    %15 = vsyncpa [#allocation3], 0
    %16 = vsyncpa [#allocation7], 0
    %17 = vsyncpa [#allocation5], 0
    %18 = vsyncpa [#allocation4], 0
    %19 = vsyncpa [#allocation12], 0
    loop: start=0, step=1, limit=4
    $region2: #{forward.1} parent=1 // loop_pre_header
      _
    $region3: #{forward.1} parent=1 // loop_header
      %s21 = sphi 0, %s25
      %p22 = scmp.ge.s32.totalorder %s21, 4
      %s31 = sphi 0, %s33
      %s34 = sphi 0, %s31
      %s35 = sphi 0, %s34
      %s51 = sphi 0, %s35
      %s55 = sphi 0, %s55
      %s57 = sphi 0, %s55
      %s58 = sphi 0, %s57
      %s72 = sphi 0, %s58
      %s76 = sphi 0, %s76
      %s78 = sphi 0, %s76
      %s79 = sphi 0, %s78
      %s93 = sphi 0, %s79
      %s97 = sphi 0, %s97
      %s99 = sphi 0, %s97
      %s100 = sphi 0, %s99
      %s114 = sphi 0, %s100
      %s118 = sphi 0, %s118
      %s120 = sphi 0, %s118
      %s121 = sphi 0, %s120
      %s135 = sphi 0, %s121
      %s139 = sphi 0, %s139
      %s141 = sphi 0, %s139
      %s142 = sphi 0, %s141
      %s156 = sphi 0, %s142
      %s160 = sphi 0, %s160
      %s162 = sphi 0, %s160
      %s163 = sphi 0, %s162
      %s177 = sphi 0, %s163
      %s181 = sphi 0, %s181
      %s183 = sphi 0, %s181
      %s184 = sphi 0, %s183
      %s198 = sphi 0, %s184
      %s202 = sphi 0, %s202
      %s204 = sphi 0, %s202
      %s205 = sphi 0, %s204
      %s219 = sphi 0, %s205
      %s223 = sphi 0, %s223
      %s225 = sphi 0, %s223
      %s226 = sphi 0, %s225
      %s240 = sphi 0, %s226
      %s246 = sphi 0, %s248
      %s249 = sphi 0, %s246
      %s250 = sphi 0, %s249
      %s266 = sphi 0, %s250
    $region4: #{forward.1} parent=1 // loop_header_branch
      %24 = sbr.rel (%p22) target = $region8
    $region5: #{forward.1} parent=1 // loop_body
      %s26 = ssub.s32 %s21, 1
      %s27 = ssub.s32 %s21, 2
      %s28 = sadd.s32 %s21, 1
      %s29 = ssub.s32 %s21, %s28
      %p30 = scmp.eq.s32.totalorder %s29, 0
      %s32 = sadd.s32 %s31, 1
      %s33 = scalar_select %p30, %s31, %s32
      %p36 = pneg %p30
      %p37 = scmp.eq.s32.totalorder %s21, 1
      %p38 = por %p36, %p37
      %p39 = scmp.ne.s32.totalorder %s31, %s34
      %p40 = scmp.eq.s32.totalorder %s21, 0
      %p41 = por %p39, %p40
      %p42 = scmp.ne.s32.totalorder %s31, %s34
      %p43 = scmp.eq.s32.totalorder %s26, 1
      %p44 = por %p42, %p43
      %p45 = scmp.ne.s32.totalorder %s34, %s35
      %p46 = scmp.eq.s32.totalorder %s26, 0
      %p47 = por %p45, %p46
      %p48 = scmp.ne.s32.totalorder %s34, %s35
      %p49 = scmp.eq.s32.totalorder %s27, 1
      %p50 = por %p48, %p49
      %p52 = scmp.ne.s32.totalorder %s35, %s51
      %p53 = scmp.eq.s32.totalorder %s27, 0
      %p54 = por %p52, %p53
      %s56 = sadd.s32 %s55, 1
      %p59 = scmp.eq.s32.totalorder %s21, 1
      %p60 = scmp.ne.s32.totalorder %s55, %s57
      %p61 = scmp.eq.s32.totalorder %s21, 0
      %p62 = por %p60, %p61
      %p63 = scmp.ne.s32.totalorder %s55, %s57
      %p64 = scmp.eq.s32.totalorder %s26, 1
      %p65 = por %p63, %p64
      %p66 = scmp.ne.s32.totalorder %s57, %s58
      %p67 = scmp.eq.s32.totalorder %s26, 0
      %p68 = por %p66, %p67
      %p69 = scmp.ne.s32.totalorder %s57, %s58
      %p70 = scmp.eq.s32.totalorder %s27, 1
      %p71 = por %p69, %p70
      %p73 = scmp.ne.s32.totalorder %s58, %s72
      %p74 = scmp.eq.s32.totalorder %s27, 0
      %p75 = por %p73, %p74
      %s77 = sadd.s32 %s76, 1
      %p80 = scmp.eq.s32.totalorder %s21, 1
      %p81 = scmp.ne.s32.totalorder %s76, %s78
      %p82 = scmp.eq.s32.totalorder %s21, 0
      %p83 = por %p81, %p82
      %p84 = scmp.ne.s32.totalorder %s76, %s78
      %p85 = scmp.eq.s32.totalorder %s26, 1
      %p86 = por %p84, %p85
      %p87 = scmp.ne.s32.totalorder %s78, %s79
      %p88 = scmp.eq.s32.totalorder %s26, 0
      %p89 = por %p87, %p88
      %p90 = scmp.ne.s32.totalorder %s78, %s79
      %p91 = scmp.eq.s32.totalorder %s27, 1
      %p92 = por %p90, %p91
      %p94 = scmp.ne.s32.totalorder %s79, %s93
      %p95 = scmp.eq.s32.totalorder %s27, 0
      %p96 = por %p94, %p95
      %s98 = sadd.s32 %s97, 1
      %p101 = scmp.eq.s32.totalorder %s21, 1
      %p102 = scmp.ne.s32.totalorder %s97, %s99
      %p103 = scmp.eq.s32.totalorder %s21, 0
      %p104 = por %p102, %p103
      %p105 = scmp.ne.s32.totalorder %s97, %s99
      %p106 = scmp.eq.s32.totalorder %s26, 1
      %p107 = por %p105, %p106
      %p108 = scmp.ne.s32.totalorder %s99, %s100
      %p109 = scmp.eq.s32.totalorder %s26, 0
      %p110 = por %p108, %p109
      %p111 = scmp.ne.s32.totalorder %s99, %s100
      %p112 = scmp.eq.s32.totalorder %s27, 1
      %p113 = por %p111, %p112
      %p115 = scmp.ne.s32.totalorder %s100, %s114
      %p116 = scmp.eq.s32.totalorder %s27, 0
      %p117 = por %p115, %p116
      %s119 = sadd.s32 %s118, 1
      %p122 = scmp.eq.s32.totalorder %s21, 1
      %p123 = scmp.ne.s32.totalorder %s118, %s120
      %p124 = scmp.eq.s32.totalorder %s21, 0
      %p125 = por %p123, %p124
      %p126 = scmp.ne.s32.totalorder %s118, %s120
      %p127 = scmp.eq.s32.totalorder %s26, 1
      %p128 = por %p126, %p127
      %p129 = scmp.ne.s32.totalorder %s120, %s121
      %p130 = scmp.eq.s32.totalorder %s26, 0
      %p131 = por %p129, %p130
      %p132 = scmp.ne.s32.totalorder %s120, %s121
      %p133 = scmp.eq.s32.totalorder %s27, 1
      %p134 = por %p132, %p133
      %p136 = scmp.ne.s32.totalorder %s121, %s135
      %p137 = scmp.eq.s32.totalorder %s27, 0
      %p138 = por %p136, %p137
      %s140 = sadd.s32 %s139, 1
      %p143 = scmp.eq.s32.totalorder %s21, 1
      %p144 = scmp.ne.s32.totalorder %s139, %s141
      %p145 = scmp.eq.s32.totalorder %s21, 0
      %p146 = por %p144, %p145
      %p147 = scmp.ne.s32.totalorder %s139, %s141
      %p148 = scmp.eq.s32.totalorder %s26, 1
      %p149 = por %p147, %p148
      %p150 = scmp.ne.s32.totalorder %s141, %s142
      %p151 = scmp.eq.s32.totalorder %s26, 0
      %p152 = por %p150, %p151
      %p153 = scmp.ne.s32.totalorder %s141, %s142
      %p154 = scmp.eq.s32.totalorder %s27, 1
      %p155 = por %p153, %p154
      %p157 = scmp.ne.s32.totalorder %s142, %s156
      %p158 = scmp.eq.s32.totalorder %s27, 0
      %p159 = por %p157, %p158
      %s161 = sadd.s32 %s160, 1
      %p164 = scmp.eq.s32.totalorder %s21, 1
      %p165 = scmp.ne.s32.totalorder %s160, %s162
      %p166 = scmp.eq.s32.totalorder %s21, 0
      %p167 = por %p165, %p166
      %p168 = scmp.ne.s32.totalorder %s160, %s162
      %p169 = scmp.eq.s32.totalorder %s26, 1
      %p170 = por %p168, %p169
      %p171 = scmp.ne.s32.totalorder %s162, %s163
      %p172 = scmp.eq.s32.totalorder %s26, 0
      %p173 = por %p171, %p172
      %p174 = scmp.ne.s32.totalorder %s162, %s163
      %p175 = scmp.eq.s32.totalorder %s27, 1
      %p176 = por %p174, %p175
      %p178 = scmp.ne.s32.totalorder %s163, %s177
      %p179 = scmp.eq.s32.totalorder %s27, 0
      %p180 = por %p178, %p179
      %s182 = sadd.s32 %s181, 1
      %p185 = scmp.eq.s32.totalorder %s21, 1
      %p186 = scmp.ne.s32.totalorder %s181, %s183
      %p187 = scmp.eq.s32.totalorder %s21, 0
      %p188 = por %p186, %p187
      %p189 = scmp.ne.s32.totalorder %s181, %s183
      %p190 = scmp.eq.s32.totalorder %s26, 1
      %p191 = por %p189, %p190
      %p192 = scmp.ne.s32.totalorder %s183, %s184
      %p193 = scmp.eq.s32.totalorder %s26, 0
      %p194 = por %p192, %p193
      %p195 = scmp.ne.s32.totalorder %s183, %s184
      %p196 = scmp.eq.s32.totalorder %s27, 1
      %p197 = por %p195, %p196
      %p199 = scmp.ne.s32.totalorder %s184, %s198
      %p200 = scmp.eq.s32.totalorder %s27, 0
      %p201 = por %p199, %p200
      %s203 = sadd.s32 %s202, 1
      %p206 = scmp.eq.s32.totalorder %s21, 1
      %p207 = scmp.ne.s32.totalorder %s202, %s204
      %p208 = scmp.eq.s32.totalorder %s21, 0
      %p209 = por %p207, %p208
      %p210 = scmp.ne.s32.totalorder %s202, %s204
      %p211 = scmp.eq.s32.totalorder %s26, 1
      %p212 = por %p210, %p211
      %p213 = scmp.ne.s32.totalorder %s204, %s205
      %p214 = scmp.eq.s32.totalorder %s26, 0
      %p215 = por %p213, %p214
      %p216 = scmp.ne.s32.totalorder %s204, %s205
      %p217 = scmp.eq.s32.totalorder %s27, 1
      %p218 = por %p216, %p217
      %p220 = scmp.ne.s32.totalorder %s205, %s219
      %p221 = scmp.eq.s32.totalorder %s27, 0
      %p222 = por %p220, %p221
      %s224 = sadd.s32 %s223, 1
      %p227 = scmp.eq.s32.totalorder %s21, 1
      %p228 = scmp.ne.s32.totalorder %s223, %s225
      %p229 = scmp.eq.s32.totalorder %s21, 0
      %p230 = por %p228, %p229
      %p231 = scmp.ne.s32.totalorder %s223, %s225
      %p232 = scmp.eq.s32.totalorder %s26, 1
      %p233 = por %p231, %p232
      %p234 = scmp.ne.s32.totalorder %s225, %s226
      %p235 = scmp.eq.s32.totalorder %s26, 0
      %p236 = por %p234, %p235
      %p237 = scmp.ne.s32.totalorder %s225, %s226
      %p238 = scmp.eq.s32.totalorder %s27, 1
      %p239 = por %p237, %p238
      %p241 = scmp.ne.s32.totalorder %s226, %s240
      %p242 = scmp.eq.s32.totalorder %s27, 0
      %p243 = por %p241, %p242
      %s244 = ssub.s32 %s21, %s28
      %p245 = scmp.eq.s32.totalorder %s244, 0
      %s247 = sadd.s32 %s246, 1
      %s248 = scalar_select %p245, %s246, %s247
      %p251 = pneg %p245
      %p252 = scmp.eq.s32.totalorder %s21, 1
      %p253 = por %p251, %p252
      %p254 = scmp.ne.s32.totalorder %s246, %s249
      %p255 = scmp.eq.s32.totalorder %s21, 0
      %p256 = por %p254, %p255
      %p257 = scmp.ne.s32.totalorder %s246, %s249
      %p258 = scmp.eq.s32.totalorder %s26, 1
      %p259 = por %p257, %p258
      %p260 = scmp.ne.s32.totalorder %s249, %s250
      %p261 = scmp.eq.s32.totalorder %s26, 0
      %p262 = por %p260, %p261
      %p263 = scmp.ne.s32.totalorder %s249, %s250
      %p264 = scmp.eq.s32.totalorder %s27, 1
      %p265 = por %p263, %p264
      %p267 = scmp.ne.s32.totalorder %s250, %s266
      %p268 = scmp.eq.s32.totalorder %s27, 0
      %p269 = por %p267, %p268
      %p270 = scmp.le.s32.totalorder 1, %s21
      %p271 = scmp.lt.s32.totalorder %s21, 3
      %p272 = pnand %p270, %p271
      %p273 = pneg %p272
      // Predicated region
      $region9: #{forward.1} parent=5 // pred_check
        _
      $region10: #{forward.1} parent=5 // pred_check_branch
        %275 = sbr.rel (%p272) target = $region12
      $region11: #{forward.1} parent=5 // pred_region
        %s276 = ssub.s32 %s21, 1
        // Predicated region
        $region13: #{forward.1} parent=11 // pred_check
          %p277 = pneg %p68
        $region14: #{forward.1} parent=11 // pred_check_branch
          %279 = sbr.rel (%p277) target = $region16
        $region15: #{forward.1} parent=11 // pred_region
          %s281 = ssub.s32 2048, 2048
          %282 = vsyncadd [#allocation3], %s281
          %s283 = sshll.u32 [#allocation2], 4
          %s284 = int_to_ptr.vmem [resolvable:$true] %s283
          %289 = dma.hbm_to_vmem [thread:$0]  %s1, 2048, %s284, [#allocation3], 128, 128, 8
        $region16: #{forward.1} parent=11 // pred_fallthru
          _
        // Predicated region
        $region17: #{forward.1} parent=11 // pred_check
          %p290 = pneg %p89
        $region18: #{forward.1} parent=11 // pred_check_branch
          %292 = sbr.rel (%p290) target = $region20
        $region19: #{forward.1} parent=11 // pred_region
          %s294 = ssub.s32 1536, 1536
          %295 = vsyncadd [#allocation7], %s294
          %s296 = sshll.u32 [#allocation6], 4
          %s297 = int_to_ptr.vmem [resolvable:$true] %s296
          %302 = dma.hbm_to_vmem [thread:$0]  %s2, 1536, %s297, [#allocation7], 128, 128, 8
        $region20: #{forward.1} parent=11 // pred_fallthru
          _
        // Predicated region
        $region21: #{forward.1} parent=11 // pred_check
          %p303 = pneg %p110
        $region22: #{forward.1} parent=11 // pred_check_branch
          %305 = sbr.rel (%p303) target = $region24
        $region23: #{forward.1} parent=11 // pred_region
          %s307 = ssub.s32 384, 384
          %308 = vsyncadd [#allocation7], %s307
          %s309 = sshll.u32 [#allocation8], 4
          %s310 = int_to_ptr.vmem [resolvable:$true] %s309
          %315 = dma.hbm_to_vmem [thread:$0]  %s3, 384, %s310, [#allocation7], 128, 128, 8
        $region24: #{forward.1} parent=11 // pred_fallthru
          _
        // Predicated region
        $region25: #{forward.1} parent=11 // pred_check
          %p316 = pneg %p131
        $region26: #{forward.1} parent=11 // pred_check_branch
          %318 = sbr.rel (%p316) target = $region28
        $region27: #{forward.1} parent=11 // pred_region
          %s320 = ssub.s32 256, 256
          %321 = vsyncadd [#allocation5], %s320
          %s322 = sshll.u32 %s4, 4
          %s323 = int_to_ptr.vmem [resolvable:$true] %s322
          %328 = dma.vmem_to_smem %s323, 256, [#allocation9], [#allocation5], 128, 128, 8
        $region28: #{forward.1} parent=11 // pred_fallthru
          _
        // Predicated region
        $region29: #{forward.1} parent=11 // pred_check
          %p329 = pneg %p152
        $region30: #{forward.1} parent=11 // pred_check_branch
          %331 = sbr.rel (%p329) target = $region32
        $region31: #{forward.1} parent=11 // pred_region
          %s333 = ssub.s32 16, 16
          %334 = vsyncadd [#allocation4], %s333
          %337 = dma.hbm_to_smem %s5, 16, [#allocation10], [#allocation4]
        $region32: #{forward.1} parent=11 // pred_fallthru
          _
        // Predicated region
        $region33: #{forward.1} parent=11 // pred_check
          %p338 = pneg %p173
        $region34: #{forward.1} parent=11 // pred_check_branch
          %340 = sbr.rel (%p338) target = $region36
        $region35: #{forward.1} parent=11 // pred_region
          %s342 = ssub.s32 512, 512
          %343 = vsyncadd [#allocation12], %s342
          %s344 = sshll.u32 [#allocation11], 4
          %s345 = int_to_ptr.vmem [resolvable:$true] %s344
          %350 = dma.hbm_to_vmem [thread:$0]  %s6, 512, %s345, [#allocation12], 128, 128, 8
        $region36: #{forward.1} parent=11 // pred_fallthru
          _
        // Predicated region
        $region37: #{forward.1} parent=11 // pred_check
          %p351 = pneg %p194
        $region38: #{forward.1} parent=11 // pred_check_branch
          %353 = sbr.rel (%p351) target = $region40
        $region39: #{forward.1} parent=11 // pred_region
          _
        $region40: #{forward.1} parent=11 // pred_fallthru
          _
        // Predicated region
        $region41: #{forward.1} parent=11 // pred_check
          %p354 = pneg %p215
        $region42: #{forward.1} parent=11 // pred_check_branch
          %356 = sbr.rel (%p354) target = $region44
        $region43: #{forward.1} parent=11 // pred_region
          _
        $region44: #{forward.1} parent=11 // pred_fallthru
          _
        // Predicated region
        $region45: #{forward.1} parent=11 // pred_check
          %p357 = pneg %p236
        $region46: #{forward.1} parent=11 // pred_check_branch
          %359 = sbr.rel (%p357) target = $region48
        $region47: #{forward.1} parent=11 // pred_region
          _
        $region48: #{forward.1} parent=11 // pred_fallthru
          _
      $region12: #{forward.1} parent=5 // pred_fallthru
        _
      %p360 = scmp.lt.s32.totalorder %s21, 2
      // Predicated region
      $region49: #{forward.1} parent=5 // pred_check
        %p361 = pneg %p360
      $region50: #{forward.1} parent=5 // pred_check_branch
        %363 = sbr.rel (%p361) target = $region52
      $region51: #{forward.1} parent=5 // pred_region
        // Predicated region
        $region53: #{forward.1} parent=51 // pred_check
          %p364 = pneg %p41
        $region54: #{forward.1} parent=51 // pred_check_branch
          %366 = sbr.rel (%p364) target = $region56
        $region55: #{forward.1} parent=51 // pred_region
          %p367 = scmp.lt.s32.totalorder %s21, 1
          %s368 = scalar_select %p367, %s21, 1
          %s369 = smul.addr %s368, 8
          %s370 = scalar_lea.vmem %s0, %s369
        $region56: #{forward.1} parent=51 // pred_fallthru
          _
      $region52: #{forward.1} parent=5 // pred_fallthru
        _
      %p371 = scmp.le.s32.totalorder 1, %s21
      %p372 = scmp.lt.s32.totalorder %s21, 3
      %p373 = pnand %p371, %p372
      %p374 = pneg %p373
      // Predicated region
      $region57: #{forward.1} parent=5 // pred_check
        _
      $region58: #{forward.1} parent=5 // pred_check_branch
        %376 = sbr.rel (%p373) target = $region60
      $region59: #{forward.1} parent=5 // pred_region
        %s377 = ssub.s32 %s21, 1
        // Predicated region
        $region61: #{forward.1} parent=59 // pred_check
          %p378 = pneg %p68
        $region62: #{forward.1} parent=59 // pred_check_branch
          %380 = sbr.rel (%p378) target = $region64
        $region63: #{forward.1} parent=59 // pred_region
          %381 = dma.done [#allocation3], 2048
        $region64: #{forward.1} parent=59 // pred_fallthru
          _
        // Predicated region
        $region65: #{forward.1} parent=59 // pred_check
          %p382 = pneg %p89
        $region66: #{forward.1} parent=59 // pred_check_branch
          %384 = sbr.rel (%p382) target = $region68
        $region67: #{forward.1} parent=59 // pred_region
          %385 = dma.done [#allocation7], 1536
        $region68: #{forward.1} parent=59 // pred_fallthru
          _
        // Predicated region
        $region69: #{forward.1} parent=59 // pred_check
          %p386 = pneg %p110
        $region70: #{forward.1} parent=59 // pred_check_branch
          %388 = sbr.rel (%p386) target = $region72
        $region71: #{forward.1} parent=59 // pred_region
          %389 = dma.done [#allocation7], 384
        $region72: #{forward.1} parent=59 // pred_fallthru
          _
        // Predicated region
        $region73: #{forward.1} parent=59 // pred_check
          %p390 = pneg %p131
        $region74: #{forward.1} parent=59 // pred_check_branch
          %392 = sbr.rel (%p390) target = $region76
        $region75: #{forward.1} parent=59 // pred_region
          %393 = dma.done [#allocation5], 256
        $region76: #{forward.1} parent=59 // pred_fallthru
          _
        // Predicated region
        $region77: #{forward.1} parent=59 // pred_check
          %p394 = pneg %p152
        $region78: #{forward.1} parent=59 // pred_check_branch
          %396 = sbr.rel (%p394) target = $region80
        $region79: #{forward.1} parent=59 // pred_region
          %397 = dma.done [#allocation4], 16
        $region80: #{forward.1} parent=59 // pred_fallthru
          _
        // Predicated region
        $region81: #{forward.1} parent=59 // pred_check
          %p398 = pneg %p173
        $region82: #{forward.1} parent=59 // pred_check_branch
          %400 = sbr.rel (%p398) target = $region84
        $region83: #{forward.1} parent=59 // pred_region
          %401 = dma.done [#allocation12], 512
        $region84: #{forward.1} parent=59 // pred_fallthru
          _
        %402 = sfence
        %p403 = scmp.lt.s32.totalorder %s26, 1
        %s404 = scalar_select %p403, %s26, 1
        %s405 = smul.addr %s404, 8
        %s406 = scalar_lea.vmem %s0, %s405
        %p407 = pneg %p47
        %p408 = pneg %p44
        %p409 = pneg %p68
        %p410 = pneg %p65
        %p411 = pneg %p89
        %p412 = pneg %p86
        %p413 = pneg %p110
        %p414 = pneg %p107
        %p415 = pneg %p131
        %p416 = pneg %p128
        %p417 = pneg %p152
        %p418 = pneg %p149
        %p419 = pneg %p173
        %p420 = pneg %p170
        %p421 = pneg %p194
        %p422 = pneg %p191
        %p423 = pneg %p215
        %p424 = pneg %p212
        %p425 = pneg %p236
        %p426 = pneg %p233
        %p427 = pneg %p262
        %p428 = pneg %p259
        %p429 = scmp.lt.s32.totalorder %s26, 1
        %s430 = scalar_select %p429, %s26, 1
        %s431 = smul.addr %s430, 2
        %s432 = scalar_lea.vmem %s10, %s431
        %p433 = scmp.lt.s32.totalorder %s26, 1
        %s434 = scalar_select %p433, %s26, 1
        %s435 = smul.addr %s434, 8
        %s436 = scalar_lea.vmem %s0, %s435
        %p437 = scmp.lt.s32.totalorder %s26, 1
        %s438 = scalar_select %p437, %s26, 1
        %s439 = smul.addr %s438, 2
        %s440 = scalar_lea.vmem %s10, %s439
        %v441 = vld [vmem:[#allocation2] sm:$0xff]
        %v442 = vld [vmem:[#allocation2 + $0x8] sm:$0xff]
        %v443 = vld [vmem:[#allocation2 + $0x10] sm:$0xff]
        %v444 = vld [vmem:[#allocation2 + $0x18] sm:$0xff]
        %v445 = vld [vmem:[#allocation2 + $0x20] sm:$0xff]
        %v446 = vld [vmem:[#allocation2 + $0x28] sm:$0xff]
        %v447 = vld [vmem:[#allocation2 + $0x30] sm:$0xff]
        %v448 = vld [vmem:[#allocation2 + $0x38] sm:$0xff]
        %v449 = vld [vmem:[#allocation2 + $0x40] sm:$0xff]
        %v450 = vld [vmem:[#allocation2 + $0x48] sm:$0xff]
        %v451 = vld [vmem:[#allocation2 + $0x50] sm:$0xff]
        %v452 = vld [vmem:[#allocation2 + $0x58] sm:$0xff]
        %v453 = vld [vmem:[#allocation2 + $0x60] sm:$0xff]
        %v454 = vld [vmem:[#allocation2 + $0x68] sm:$0xff]
        %v455 = vld [vmem:[#allocation2 + $0x70] sm:$0xff]
        %v456 = vld [vmem:[#allocation2 + $0x78] sm:$0xff]
        %v457 = vld [vmem:[#allocation6] sm:$0xff]
        %v458 = vld [vmem:[#allocation6 + $0x8] sm:$0xff]
        %v459 = vld [vmem:[#allocation6 + $0x10] sm:$0xff]
        %v460 = vld [vmem:[#allocation6 + $0x18] sm:$0xff]
        %v461 = vld [vmem:[#allocation6 + $0x20] sm:$0xff]
        %v462 = vld [vmem:[#allocation6 + $0x28] sm:$0xff]
        %v463 = vld [vmem:[#allocation6 + $0x30] sm:$0xff]
        %v464 = vld [vmem:[#allocation6 + $0x38] sm:$0xff]
        %v465 = vld [vmem:[#allocation6 + $0x40] sm:$0xff]
        %v466 = vld [vmem:[#allocation6 + $0x48] sm:$0xff]
        %v467 = vld [vmem:[#allocation6 + $0x50] sm:$0xff]
        %v468 = vld [vmem:[#allocation6 + $0x58] sm:$0xff]
        %v469 = vld [vmem:[#allocation8] sm:$0xff]
        %s470 = scalar_lea.vmem [#allocation8], 8
        %v471 = vld [vmem:[%s470] sm:$0xff]
        %s472 = scalar_lea.vmem [#allocation8], 16
        %v473 = vld [vmem:[%s472] sm:$0xff]
        %v474 = vlaneseq
        %v475 = vand.u32 %v474, 127
        %v476 = vld [vmem:[%s436] sm:$0xff]
        %v477 = vmul.f32 %v476, %v476
        %478 = vmatprep.subr.mxu0 0.0
        %479 = vmatpush1.msra.mxu0 %v441
        %480 = vmatprep.subr.mxu0 0.0
        %481 = vmatpush1.msra.mxu0 %v442
        %482 = vmatprep.subr.mxu0 0.0
        %483 = vmatpush1.msra.mxu0 %v443
        %484 = vmatprep.subr.mxu0 0.0
        %485 = vmatpush1.msra.mxu0 %v444
        %486 = vmatprep.subr.mxu0 0.0
        %487 = vmatpush1.msra.mxu0 %v445
        %488 = vmatprep.subr.mxu0 0.0
        %489 = vmatpush1.msra.mxu0 %v446
        %490 = vmatprep.subr.mxu0 0.0
        %491 = vmatpush1.msra.mxu0 %v447
        %492 = vmatprep.subr.mxu0 0.0
        %493 = vmatpush1.msra.mxu0 %v448
        %494 = vmatprep.subr.mxu0 0.0
        %495 = vmatpush1.msra.mxu0 %v449
        %496 = vmatprep.subr.mxu0 0.0
        %497 = vmatpush1.msra.mxu0 %v450
        %498 = vmatprep.subr.mxu0 0.0
        %499 = vmatpush1.msra.mxu0 %v451
        %500 = vmatprep.subr.mxu0 0.0
        %501 = vmatpush1.msra.mxu0 %v452
        %502 = vmatprep.subr.mxu0 0.0
        %503 = vmatpush1.msra.mxu0 %v453
        %504 = vmatprep.subr.mxu0 0.0
        %505 = vmatpush1.msra.mxu0 %v454
        %506 = vmatprep.subr.mxu0 0.0
        %507 = vmatpush1.msra.mxu0 %v455
        %508 = vmatprep.subr.mxu0 0.0
        %509 = vmatpush1.msra.mxu0 %v456
        %510 = vmatprep.subr.mxu0 0.0
        %511 = vmatpush1.msra.mxu0 0.0
        %512 = vmatprep.subr.mxu0 0.0
        %513 = vmatpush1.msra.mxu0 0.0
        %514 = vmatprep.subr.mxu0 0.0
        %515 = vmatpush1.msra.mxu0 0.0
        %516 = vmatprep.subr.mxu0 0.0
        %517 = vmatpush1.msra.mxu0 0.0
        %518 = vmatprep.subr.mxu0 0.0
        %519 = vmatpush1.msra.mxu0 0.0
        %520 = vmatprep.subr.mxu0 0.0
        %521 = vmatpush1.msra.mxu0 0.0
        %522 = vmatprep.subr.mxu0 0.0
        %523 = vmatpush1.msra.mxu0 0.0
        %524 = vmatprep.subr.mxu0 0.0
        %525 = vmatpush1.msra.mxu0 0.0
        %526 = vmatprep.subr.mxu0 0.0
        %527 = vmatpush1.msra.mxu0 0.0
        %528 = vmatprep.subr.mxu0 0.0
        %529 = vmatpush1.msra.mxu0 0.0
        %530 = vmatprep.subr.mxu0 0.0
        %531 = vmatpush1.msra.mxu0 0.0
        %532 = vmatprep.subr.mxu0 0.0
        %533 = vmatpush1.msra.mxu0 0.0
        %534 = vmatprep.subr.mxu0 0.0
        %535 = vmatpush1.msra.mxu0 0.0
        %536 = vmatprep.subr.mxu0 0.0
        %537 = vmatpush1.msra.mxu0 0.0
        %538 = vmatprep.subr.mxu0 0.0
        %539 = vmatpush1.msra.mxu0 0.0
        %540 = vmatprep.subr.mxu0 0.0
        %541 = vmatpush1.msra.mxu0 0.0
        %542 = vmatprep.mubr.f32.mxu0 0.0
        %543 = vmatmul.mubr.f32.gmra.mrb[0].mxu0 %v477
        %v544 = vpop.f32.mrb[0].mxu0
        %v545 = vadd.f32 1e-05, %v544
        %v546 = vpop.f32.mrb[0].mxu0
        %547 = vdwg.mxu0
        %v548 = vlog2.pop %v545
        %v549 = vmul.f32 %v548, 0.6931472
        %vm550 = vcmask 523264
        %v551 = vsel %vm550, %v549, 0.0
        %v552 = vrot.slane %v551, 4
        %v553 = vadd.f32 %v551, %v552
        %v554 = vrot.slane %v553, 2
        %v555 = vadd.f32 %v553, %v554
        %v556 = vrot.slane %v555, 1
        %v557 = vadd.f32 %v555, %v556
        %v558 = vrcp.pop 8.0
        %v559 = vmul.f32 %v557, %v558
        %v561 = vsel %vm550, %v457, 0
        %v564 = vsel %vm550, %v458, 0
        %v567 = vsel %vm550, %v459, 0
        %v570 = vsel %vm550, %v460, 0
        %v573 = vsel %vm550, %v461, 0
        %v576 = vsel %vm550, %v462, 0
        %v579 = vsel %vm550, %v463, 0
        %v582 = vsel %vm550, %v464, 0
        %v585 = vsel %vm550, %v465, 0
        %v588 = vsel %vm550, %v466, 0
        %v591 = vsel %vm550, %v467, 0
        %v594 = vsel %vm550, %v468, 0
        %v597 = vsel %vm550, %v549, 0
        %599 = vmatprep.subr.mxu0 0.0
        %600 = vmatpush1.xpose.msra.mxu0 %v597
        %601 = vmatprep.subr.mxu0 0.0
        %602 = vmatpush1.xpose.msra.mxu0 0.0
        %603 = vmatprep.subr.mxu0 0.0
        %604 = vmatpush1.xpose.msra.mxu0 0.0
        %605 = vmatprep.subr.mxu0 0.0
        %606 = vmatpush1.xpose.msra.mxu0 0.0
        %607 = vmatprep.subr.mxu0 0.0
        %608 = vmatpush1.xpose.msra.mxu0 0.0
        %609 = vmatprep.subr.mxu0 0.0
        %610 = vmatpush1.xpose.msra.mxu0 0.0
        %611 = vmatprep.subr.mxu0 0.0
        %612 = vmatpush1.xpose.msra.mxu0 0.0
        %613 = vmatprep.subr.mxu0 0.0
        %614 = vmatpush1.xpose.msra.mxu0 0.0
        %615 = vmatprep.subr.mxu0 0.0
        %616 = vmatpush1.xpose.msra.mxu0 0.0
        %617 = vmatprep.subr.mxu0 0.0
        %618 = vmatpush1.xpose.msra.mxu0 0.0
        %619 = vmatprep.subr.mxu0 0.0
        %620 = vmatpush1.xpose.msra.mxu0 0.0
        %621 = vmatprep.subr.mxu0 0.0
        %622 = vmatpush1.xpose.msra.mxu0 0.0
        %623 = vmatprep.subr.mxu0 0.0
        %624 = vmatpush1.xpose.msra.mxu0 0.0
        %625 = vmatprep.subr.mxu0 0.0
        %626 = vmatpush1.xpose.msra.mxu0 0.0
        %627 = vmatprep.subr.mxu0 0.0
        %628 = vmatpush1.xpose.msra.mxu0 0.0
        %629 = vmatprep.subr.mxu0 0.0
        %630 = vmatpush1.xpose.msra.mxu0 0.0
        %631 = vmatprep.subr.mxu0 0.0
        %632 = vmatpush1.xpose.msra.mxu0 0.0
        %633 = vmatprep.subr.mxu0 0.0
        %634 = vmatpush1.xpose.msra.mxu0 0.0
        %635 = vmatprep.subr.mxu0 0.0
        %636 = vmatpush1.xpose.msra.mxu0 0.0
        %637 = vmatprep.subr.mxu0 0.0
        %638 = vmatpush1.xpose.msra.mxu0 0.0
        %639 = vmatprep.subr.mxu0 0.0
        %640 = vmatpush1.xpose.msra.mxu0 0.0
        %641 = vmatprep.subr.mxu0 0.0
        %642 = vmatpush1.xpose.msra.mxu0 0.0
        %643 = vmatprep.subr.mxu0 0.0
        %644 = vmatpush1.xpose.msra.mxu0 0.0
        %645 = vmatprep.subr.mxu0 0.0
        %646 = vmatpush1.xpose.msra.mxu0 0.0
        %647 = vmatprep.subr.mxu0 0.0
        %648 = vmatpush1.xpose.msra.mxu0 0.0
        %649 = vmatprep.subr.mxu0 0.0
        %650 = vmatpush1.xpose.msra.mxu0 0.0
        %651 = vmatprep.subr.mxu0 0.0
        %652 = vmatpush1.xpose.msra.mxu0 0.0
        %653 = vmatprep.subr.mxu0 0.0
        %654 = vmatpush1.xpose.msra.mxu0 0.0
        %655 = vmatprep.subr.mxu0 0.0
        %656 = vmatpush1.xpose.msra.mxu0 0.0
        %657 = vmatprep.subr.mxu0 0.0
        %658 = vmatpush1.xpose.msra.mxu0 0.0
        %659 = vmatprep.subr.mxu0 0.0
        %660 = vmatpush1.xpose.msra.mxu0 0.0
        %661 = vmatprep.subr.mxu0 0.0
        %662 = vmatpush1.xpose.msra.mxu0 0.0
        %663 = vmatprep.mubr.f32.mxu0 0.0
        %664 = vmatmul.mubr.f32.gmra.mrb[0].mxu0 %v561
        %v665 = vpop.f32.mrb[0].mxu0
        %v666 = vadd.f32 0.0, %v665
        %v667 = vpop.f32.mrb[0].mxu0
        %668 = vmatprep.mubr.f32.mxu0 0.0
        %669 = vmatmul.mubr.f32.gmra.mrb[0].mxu0 %v564
        %v670 = vpop.f32.mrb[0].mxu0
        %v671 = vadd.f32 0.0, %v670
        %v672 = vpop.f32.mrb[0].mxu0
        %673 = vmatprep.mubr.f32.mxu0 0.0
        %674 = vmatmul.mubr.f32.gmra.mrb[0].mxu0 %v567
        %v675 = vpop.f32.mrb[0].mxu0
        %v676 = vadd.f32 0.0, %v675
        %v677 = vpop.f32.mrb[0].mxu0
        %678 = vmatprep.mubr.f32.mxu0 0.0
        %679 = vmatmul.mubr.f32.gmra.mrb[0].mxu0 %v570
        %v680 = vpop.f32.mrb[0].mxu0
        %v681 = vadd.f32 0.0, %v680
        %v682 = vpop.f32.mrb[0].mxu0
        %683 = vmatprep.mubr.f32.mxu0 0.0
        %684 = vmatmul.mubr.f32.gmra.mrb[0].mxu0 %v573
        %v685 = vpop.f32.mrb[0].mxu0
        %v686 = vadd.f32 0.0, %v685
        %v687 = vpop.f32.mrb[0].mxu0
        %688 = vmatprep.mubr.f32.mxu0 0.0
        %689 = vmatmul.mubr.f32.gmra.mrb[0].mxu0 %v576
        %v690 = vpop.f32.mrb[0].mxu0
        %v691 = vadd.f32 0.0, %v690
        %v692 = vpop.f32.mrb[0].mxu0
        %693 = vmatprep.mubr.f32.mxu0 0.0
        %694 = vmatmul.mubr.f32.gmra.mrb[0].mxu0 %v579
        %v695 = vpop.f32.mrb[0].mxu0
        %v696 = vadd.f32 0.0, %v695
        %v697 = vpop.f32.mrb[0].mxu0
        %698 = vmatprep.mubr.f32.mxu0 0.0
        %699 = vmatmul.mubr.f32.gmra.mrb[0].mxu0 %v582
        %v700 = vpop.f32.mrb[0].mxu0
        %v701 = vadd.f32 0.0, %v700
        %v702 = vpop.f32.mrb[0].mxu0
        %703 = vmatprep.mubr.f32.mxu0 0.0
        %704 = vmatmul.mubr.f32.gmra.mrb[0].mxu0 %v585
        %v705 = vpop.f32.mrb[0].mxu0
        %v706 = vadd.f32 0.0, %v705
        %v707 = vpop.f32.mrb[0].mxu0
        %708 = vmatprep.mubr.f32.mxu0 0.0
        %709 = vmatmul.mubr.f32.gmra.mrb[0].mxu0 %v588
        %v710 = vpop.f32.mrb[0].mxu0
        %v711 = vadd.f32 0.0, %v710
        %v712 = vpop.f32.mrb[0].mxu0
        %713 = vmatprep.mubr.f32.mxu0 0.0
        %714 = vmatmul.mubr.f32.gmra.mrb[0].mxu0 %v591
        %v715 = vpop.f32.mrb[0].mxu0
        %v716 = vadd.f32 0.0, %v715
        %v717 = vpop.f32.mrb[0].mxu0
        %718 = vmatprep.mubr.f32.mxu0 0.0
        %719 = vmatmul.mubr.f32.gmra.mrb[0].mxu0 %v594
        %v720 = vpop.f32.mrb[0].mxu0
        %v721 = vadd.f32 0.0, %v720
        %v722 = vpop.f32.mrb[0].mxu0
        %723 = vdwg.mxu0
        %vm724 = vcmask 64512
        %v726 = vsel %vm724, %v666, 0
        %v729 = vsel %vm724, %v671, 0
        %v732 = vsel %vm724, %v676, 0
        %v735 = vsel %vm724, %v681, 0
        %v738 = vsel %vm724, %v686, 0
        %v741 = vsel %vm724, %v691, 0
        %v744 = vsel %vm724, %v696, 0
        %v747 = vsel %vm724, %v701, 0
        %v750 = vsel %vm724, %v706, 0
        %v753 = vsel %vm724, %v711, 0
        %v756 = vsel %vm724, %v716, 0
        %v759 = vsel %vm724, %v721, 0
        %761 = vmatprep.subr.mxu0 0.0
        %762 = vmatpush1.msra.mxu0 %v469
        %763 = vmatprep.subr.mxu0 0.0
        %764 = vmatpush1.msra.mxu0 0.0
        %765 = vmatprep.subr.mxu0 0.0
        %766 = vmatpush1.msra.mxu0 0.0
        %767 = vmatprep.subr.mxu0 0.0
        %768 = vmatpush1.msra.mxu0 0.0
        %769 = vmatprep.subr.mxu0 0.0
        %770 = vmatpush1.msra.mxu0 0.0
        %771 = vmatprep.subr.mxu0 0.0
        %772 = vmatpush1.msra.mxu0 0.0
        %773 = vmatprep.subr.mxu0 0.0
        %774 = vmatpush1.msra.mxu0 0.0
        %775 = vmatprep.subr.mxu0 0.0
        %776 = vmatpush1.msra.mxu0 0.0
        %777 = vmatprep.subr.mxu0 0.0
        %778 = vmatpush1.msra.mxu0 0.0
        %779 = vmatprep.subr.mxu0 0.0
        %780 = vmatpush1.msra.mxu0 0.0
        %781 = vmatprep.subr.mxu0 0.0
        %782 = vmatpush1.msra.mxu0 0.0
        %783 = vmatprep.subr.mxu0 0.0
        %784 = vmatpush1.msra.mxu0 0.0
        %785 = vmatprep.subr.mxu0 0.0
        %786 = vmatpush1.msra.mxu0 0.0
        %787 = vmatprep.subr.mxu0 0.0
        %788 = vmatpush1.msra.mxu0 0.0
        %789 = vmatprep.subr.mxu0 0.0
        %790 = vmatpush1.msra.mxu0 0.0
        %791 = vmatprep.subr.mxu0 0.0
        %792 = vmatpush1.msra.mxu0 0.0
        %793 = vmatprep.subr.mxu0 0.0
        %794 = vmatpush1.msra.mxu0 0.0
        %795 = vmatprep.subr.mxu0 0.0
        %796 = vmatpush1.msra.mxu0 0.0
        %797 = vmatprep.subr.mxu0 0.0
        %798 = vmatpush1.msra.mxu0 0.0
        %799 = vmatprep.subr.mxu0 0.0
        %800 = vmatpush1.msra.mxu0 0.0
        %801 = vmatprep.subr.mxu0 0.0
        %802 = vmatpush1.msra.mxu0 0.0
        %803 = vmatprep.subr.mxu0 0.0
        %804 = vmatpush1.msra.mxu0 0.0
        %805 = vmatprep.subr.mxu0 0.0
        %806 = vmatpush1.msra.mxu0 0.0
        %807 = vmatprep.subr.mxu0 0.0
        %808 = vmatpush1.msra.mxu0 0.0
        %809 = vmatprep.subr.mxu0 0.0
        %810 = vmatpush1.msra.mxu0 0.0
        %811 = vmatprep.subr.mxu0 0.0
        %812 = vmatpush1.msra.mxu0 0.0
        %813 = vmatprep.subr.mxu0 0.0
        %814 = vmatpush1.msra.mxu0 0.0
        %815 = vmatprep.subr.mxu0 0.0
        %816 = vmatpush1.msra.mxu0 0.0
        %817 = vmatprep.subr.mxu0 0.0
        %818 = vmatpush1.msra.mxu0 0.0
        %819 = vmatprep.subr.mxu0 0.0
        %820 = vmatpush1.msra.mxu0 0.0
        %821 = vmatprep.subr.mxu0 0.0
        %822 = vmatpush1.msra.mxu0 0.0
        %823 = vmatprep.subr.mxu0 0.0
        %824 = vmatpush1.msra.mxu0 0.0
        %825 = vmatprep.mubr.f32.mxu0 0.0
        %826 = vmatmul.mubr.f32.gmra.mrb[0].mxu0 %v726
        %v827 = vpop.f32.mrb[0].mxu0
        %v828 = vadd.f32 0.0, %v827
        %v829 = vpop.f32.mrb[0].mxu0
        %830 = vmatprep.mubr.f32.mxu0 0.0
        %831 = vmatmul.mubr.f32.gmra.mrb[0].mxu0 %v729
        %v832 = vpop.f32.mrb[0].mxu0
        %v833 = vadd.f32 0.0, %v832
        %v834 = vpop.f32.mrb[0].mxu0
        %835 = vmatprep.mubr.f32.mxu0 0.0
        %836 = vmatmul.mubr.f32.gmra.mrb[0].mxu0 %v732
        %v837 = vpop.f32.mrb[0].mxu0
        %v838 = vadd.f32 0.0, %v837
        %v839 = vpop.f32.mrb[0].mxu0
        %840 = vmatprep.mubr.f32.mxu0 0.0
        %841 = vmatmul.mubr.f32.gmra.mrb[0].mxu0 %v735
        %v842 = vpop.f32.mrb[0].mxu0
        %v843 = vadd.f32 0.0, %v842
        %v844 = vpop.f32.mrb[0].mxu0
        %845 = vmatprep.mubr.f32.mxu0 0.0
        %846 = vmatmul.mubr.f32.gmra.mrb[0].mxu0 %v738
        %v847 = vpop.f32.mrb[0].mxu0
        %v848 = vadd.f32 0.0, %v847
        %v849 = vpop.f32.mrb[0].mxu0
        %850 = vmatprep.mubr.f32.mxu0 0.0
        %851 = vmatmul.mubr.f32.gmra.mrb[0].mxu0 %v741
        %v852 = vpop.f32.mrb[0].mxu0
        %v853 = vadd.f32 0.0, %v852
        %v854 = vpop.f32.mrb[0].mxu0
        %855 = vmatprep.mubr.f32.mxu0 0.0
        %856 = vmatmul.mubr.f32.gmra.mrb[0].mxu0 %v744
        %v857 = vpop.f32.mrb[0].mxu0
        %v858 = vadd.f32 0.0, %v857
        %v859 = vpop.f32.mrb[0].mxu0
        %860 = vmatprep.mubr.f32.mxu0 0.0
        %861 = vmatmul.mubr.f32.gmra.mrb[0].mxu0 %v747
        %v862 = vpop.f32.mrb[0].mxu0
        %v863 = vadd.f32 0.0, %v862
        %v864 = vpop.f32.mrb[0].mxu0
        %865 = vmatprep.mubr.f32.mxu0 0.0
        %866 = vmatmul.mubr.f32.gmra.mrb[0].mxu0 %v750
        %v867 = vpop.f32.mrb[0].mxu0
        %v868 = vadd.f32 0.0, %v867
        %v869 = vpop.f32.mrb[0].mxu0
        %870 = vmatprep.mubr.f32.mxu0 0.0
        %871 = vmatmul.mubr.f32.gmra.mrb[0].mxu0 %v753
        %v872 = vpop.f32.mrb[0].mxu0
        %v873 = vadd.f32 0.0, %v872
        %v874 = vpop.f32.mrb[0].mxu0
        %875 = vmatprep.mubr.f32.mxu0 0.0
        %876 = vmatmul.mubr.f32.gmra.mrb[0].mxu0 %v756
        %v877 = vpop.f32.mrb[0].mxu0
        %v878 = vadd.f32 0.0, %v877
        %v879 = vpop.f32.mrb[0].mxu0
        %880 = vmatprep.mubr.f32.mxu0 0.0
        %881 = vmatmul.mubr.f32.gmra.mrb[0].mxu0 %v759
        %v882 = vpop.f32.mrb[0].mxu0
        %v883 = vadd.f32 0.0, %v882
        %v884 = vpop.f32.mrb[0].mxu0
        %885 = vdwg.mxu0
        %886 = vmatprep.subr.mxu0 0.0
        %887 = vmatpush1.msra.mxu0 %v471
        %888 = vmatprep.subr.mxu0 0.0
        %889 = vmatpush1.msra.mxu0 0.0
        %890 = vmatprep.subr.mxu0 0.0
        %891 = vmatpush1.msra.mxu0 0.0
        %892 = vmatprep.subr.mxu0 0.0
        %893 = vmatpush1.msra.mxu0 0.0
        %894 = vmatprep.subr.mxu0 0.0
        %895 = vmatpush1.msra.mxu0 0.0
        %896 = vmatprep.subr.mxu0 0.0
        %897 = vmatpush1.msra.mxu0 0.0
        %898 = vmatprep.subr.mxu0 0.0
        %899 = vmatpush1.msra.mxu0 0.0
        %900 = vmatprep.subr.mxu0 0.0
        %901 = vmatpush1.msra.mxu0 0.0
        %902 = vmatprep.subr.mxu0 0.0
        %903 = vmatpush1.msra.mxu0 0.0
        %904 = vmatprep.subr.mxu0 0.0
        %905 = vmatpush1.msra.mxu0 0.0
        %906 = vmatprep.subr.mxu0 0.0
        %907 = vmatpush1.msra.mxu0 0.0
        %908 = vmatprep.subr.mxu0 0.0
        %909 = vmatpush1.msra.mxu0 0.0
        %910 = vmatprep.subr.mxu0 0.0
        %911 = vmatpush1.msra.mxu0 0.0
        %912 = vmatprep.subr.mxu0 0.0
        %913 = vmatpush1.msra.mxu0 0.0
        %914 = vmatprep.subr.mxu0 0.0
        %915 = vmatpush1.msra.mxu0 0.0
        %916 = vmatprep.subr.mxu0 0.0
        %917 = vmatpush1.msra.mxu0 0.0
        %918 = vmatprep.subr.mxu0 0.0
        %919 = vmatpush1.msra.mxu0 0.0
        %920 = vmatprep.subr.mxu0 0.0
        %921 = vmatpush1.msra.mxu0 0.0
        %922 = vmatprep.subr.mxu0 0.0
        %923 = vmatpush1.msra.mxu0 0.0
        %924 = vmatprep.subr.mxu0 0.0
        %925 = vmatpush1.msra.mxu0 0.0
        %926 = vmatprep.subr.mxu0 0.0
        %927 = vmatpush1.msra.mxu0 0.0
        %928 = vmatprep.subr.mxu0 0.0
        %929 = vmatpush1.msra.mxu0 0.0
        %930 = vmatprep.subr.mxu0 0.0
        %931 = vmatpush1.msra.mxu0 0.0
        %932 = vmatprep.subr.mxu0 0.0
        %933 = vmatpush1.msra.mxu0 0.0
        %934 = vmatprep.subr.mxu0 0.0
        %935 = vmatpush1.msra.mxu0 0.0
        %936 = vmatprep.subr.mxu0 0.0
        %937 = vmatpush1.msra.mxu0 0.0
        %938 = vmatprep.subr.mxu0 0.0
        %939 = vmatpush1.msra.mxu0 0.0
        %940 = vmatprep.subr.mxu0 0.0
        %941 = vmatpush1.msra.mxu0 0.0
        %942 = vmatprep.subr.mxu0 0.0
        %943 = vmatpush1.msra.mxu0 0.0
        %944 = vmatprep.subr.mxu0 0.0
        %945 = vmatpush1.msra.mxu0 0.0
        %946 = vmatprep.subr.mxu0 0.0
        %947 = vmatpush1.msra.mxu0 0.0
        %948 = vmatprep.subr.mxu0 0.0
        %949 = vmatpush1.msra.mxu0 0.0
        %950 = vmatprep.mubr.f32.mxu0 0.0
        %951 = vmatmul.mubr.f32.gmra.mrb[0].mxu0 %v726
        %v952 = vpop.f32.mrb[0].mxu0
        %v953 = vadd.f32 0.0, %v952
        %v954 = vpop.f32.mrb[0].mxu0
        %955 = vmatprep.mubr.f32.mxu0 0.0
        %956 = vmatmul.mubr.f32.gmra.mrb[0].mxu0 %v729
        %v957 = vpop.f32.mrb[0].mxu0
        %v958 = vadd.f32 0.0, %v957
        %v959 = vpop.f32.mrb[0].mxu0
        %960 = vmatprep.mubr.f32.mxu0 0.0
        %961 = vmatmul.mubr.f32.gmra.mrb[0].mxu0 %v732
        %v962 = vpop.f32.mrb[0].mxu0
        %v963 = vadd.f32 0.0, %v962
        %v964 = vpop.f32.mrb[0].mxu0
        %965 = vmatprep.mubr.f32.mxu0 0.0
        %966 = vmatmul.mubr.f32.gmra.mrb[0].mxu0 %v735
        %v967 = vpop.f32.mrb[0].mxu0
        %v968 = vadd.f32 0.0, %v967
        %v969 = vpop.f32.mrb[0].mxu0
        %970 = vmatprep.mubr.f32.mxu0 0.0
        %971 = vmatmul.mubr.f32.gmra.mrb[0].mxu0 %v738
        %v972 = vpop.f32.mrb[0].mxu0
        %v973 = vadd.f32 0.0, %v972
        %v974 = vpop.f32.mrb[0].mxu0
        %975 = vmatprep.mubr.f32.mxu0 0.0
        %976 = vmatmul.mubr.f32.gmra.mrb[0].mxu0 %v741
        %v977 = vpop.f32.mrb[0].mxu0
        %v978 = vadd.f32 0.0, %v977
        %v979 = vpop.f32.mrb[0].mxu0
        %980 = vmatprep.mubr.f32.mxu0 0.0
        %981 = vmatmul.mubr.f32.gmra.mrb[0].mxu0 %v744
        %v982 = vpop.f32.mrb[0].mxu0
        %v983 = vadd.f32 0.0, %v982
        %v984 = vpop.f32.mrb[0].mxu0
        %985 = vmatprep.mubr.f32.mxu0 0.0
        %986 = vmatmul.mubr.f32.gmra.mrb[0].mxu0 %v747
        %v987 = vpop.f32.mrb[0].mxu0
        %v988 = vadd.f32 0.0, %v987
        %v989 = vpop.f32.mrb[0].mxu0
        %990 = vmatprep.mubr.f32.mxu0 0.0
        %991 = vmatmul.mubr.f32.gmra.mrb[0].mxu0 %v750
        %v992 = vpop.f32.mrb[0].mxu0
        %v993 = vadd.f32 0.0, %v992
        %v994 = vpop.f32.mrb[0].mxu0
        %995 = vmatprep.mubr.f32.mxu0 0.0
        %996 = vmatmul.mubr.f32.gmra.mrb[0].mxu0 %v753
        %v997 = vpop.f32.mrb[0].mxu0
        %v998 = vadd.f32 0.0, %v997
        %v999 = vpop.f32.mrb[0].mxu0
        %1000 = vmatprep.mubr.f32.mxu0 0.0
        %1001 = vmatmul.mubr.f32.gmra.mrb[0].mxu0 %v756
        %v1002 = vpop.f32.mrb[0].mxu0
        %v1003 = vadd.f32 0.0, %v1002
        %v1004 = vpop.f32.mrb[0].mxu0
        %1005 = vmatprep.mubr.f32.mxu0 0.0
        %1006 = vmatmul.mubr.f32.gmra.mrb[0].mxu0 %v759
        %v1007 = vpop.f32.mrb[0].mxu0
        %v1008 = vadd.f32 0.0, %v1007
        %v1009 = vpop.f32.mrb[0].mxu0
        %1010 = vdwg.mxu0
        %1011 = vmatprep.subr.mxu0 0.0
        %1012 = vmatpush1.msra.mxu0 %v473
        %1013 = vmatprep.subr.mxu0 0.0
        %1014 = vmatpush1.msra.mxu0 0.0
        %1015 = vmatprep.subr.mxu0 0.0
        %1016 = vmatpush1.msra.mxu0 0.0
        %1017 = vmatprep.subr.mxu0 0.0
        %1018 = vmatpush1.msra.mxu0 0.0
        %1019 = vmatprep.subr.mxu0 0.0
        %1020 = vmatpush1.msra.mxu0 0.0
        %1021 = vmatprep.subr.mxu0 0.0
        %1022 = vmatpush1.msra.mxu0 0.0
        %1023 = vmatprep.subr.mxu0 0.0
        %1024 = vmatpush1.msra.mxu0 0.0
        %1025 = vmatprep.subr.mxu0 0.0
        %1026 = vmatpush1.msra.mxu0 0.0
        %1027 = vmatprep.subr.mxu0 0.0
        %1028 = vmatpush1.msra.mxu0 0.0
        %1029 = vmatprep.subr.mxu0 0.0
        %1030 = vmatpush1.msra.mxu0 0.0
        %1031 = vmatprep.subr.mxu0 0.0
        %1032 = vmatpush1.msra.mxu0 0.0
        %1033 = vmatprep.subr.mxu0 0.0
        %1034 = vmatpush1.msra.mxu0 0.0
        %1035 = vmatprep.subr.mxu0 0.0
        %1036 = vmatpush1.msra.mxu0 0.0
        %1037 = vmatprep.subr.mxu0 0.0
        %1038 = vmatpush1.msra.mxu0 0.0
        %1039 = vmatprep.subr.mxu0 0.0
        %1040 = vmatpush1.msra.mxu0 0.0
        %1041 = vmatprep.subr.mxu0 0.0
        %1042 = vmatpush1.msra.mxu0 0.0
        %1043 = vmatprep.subr.mxu0 0.0
        %1044 = vmatpush1.msra.mxu0 0.0
        %1045 = vmatprep.subr.mxu0 0.0
        %1046 = vmatpush1.msra.mxu0 0.0
        %1047 = vmatprep.subr.mxu0 0.0
        %1048 = vmatpush1.msra.mxu0 0.0
        %1049 = vmatprep.subr.mxu0 0.0
        %1050 = vmatpush1.msra.mxu0 0.0
        %1051 = vmatprep.subr.mxu0 0.0
        %1052 = vmatpush1.msra.mxu0 0.0
        %1053 = vmatprep.subr.mxu0 0.0
        %1054 = vmatpush1.msra.mxu0 0.0
        %1055 = vmatprep.subr.mxu0 0.0
        %1056 = vmatpush1.msra.mxu0 0.0
        %1057 = vmatprep.subr.mxu0 0.0
        %1058 = vmatpush1.msra.mxu0 0.0
        %1059 = vmatprep.subr.mxu0 0.0
        %1060 = vmatpush1.msra.mxu0 0.0
        %1061 = vmatprep.subr.mxu0 0.0
        %1062 = vmatpush1.msra.mxu0 0.0
        %1063 = vmatprep.subr.mxu0 0.0
        %1064 = vmatpush1.msra.mxu0 0.0
        %1065 = vmatprep.subr.mxu0 0.0
        %1066 = vmatpush1.msra.mxu0 0.0
        %1067 = vmatprep.subr.mxu0 0.0
        %1068 = vmatpush1.msra.mxu0 0.0
        %1069 = vmatprep.subr.mxu0 0.0
        %1070 = vmatpush1.msra.mxu0 0.0
        %1071 = vmatprep.subr.mxu0 0.0
        %1072 = vmatpush1.msra.mxu0 0.0
        %1073 = vmatprep.subr.mxu0 0.0
        %1074 = vmatpush1.msra.mxu0 0.0
        %1075 = vmatprep.mubr.f32.mxu0 0.0
        %1076 = vmatmul.mubr.f32.gmra.mrb[0].mxu0 %v726
        %v1077 = vpop.f32.mrb[0].mxu0
        %v1078 = vadd.f32 0.0, %v1077
        %v1079 = vpop.f32.mrb[0].mxu0
        %1080 = vmatprep.mubr.f32.mxu0 0.0
        %1081 = vmatmul.mubr.f32.gmra.mrb[0].mxu0 %v729
        %v1082 = vpop.f32.mrb[0].mxu0
        %v1083 = vadd.f32 0.0, %v1082
        %v1084 = vpop.f32.mrb[0].mxu0
        %1085 = vmatprep.mubr.f32.mxu0 0.0
        %1086 = vmatmul.mubr.f32.gmra.mrb[0].mxu0 %v732
        %v1087 = vpop.f32.mrb[0].mxu0
        %v1088 = vadd.f32 0.0, %v1087
        %v1089 = vpop.f32.mrb[0].mxu0
        %1090 = vmatprep.mubr.f32.mxu0 0.0
        %1091 = vmatmul.mubr.f32.gmra.mrb[0].mxu0 %v735
        %v1092 = vpop.f32.mrb[0].mxu0
        %v1093 = vadd.f32 0.0, %v1092
        %v1094 = vpop.f32.mrb[0].mxu0
        %1095 = vmatprep.mubr.f32.mxu0 0.0
        %1096 = vmatmul.mubr.f32.gmra.mrb[0].mxu0 %v738
        %v1097 = vpop.f32.mrb[0].mxu0
        %v1098 = vadd.f32 0.0, %v1097
        %v1099 = vpop.f32.mrb[0].mxu0
        %1100 = vmatprep.mubr.f32.mxu0 0.0
        %1101 = vmatmul.mubr.f32.gmra.mrb[0].mxu0 %v741
        %v1102 = vpop.f32.mrb[0].mxu0
        %v1103 = vadd.f32 0.0, %v1102
        %v1104 = vpop.f32.mrb[0].mxu0
        %1105 = vmatprep.mubr.f32.mxu0 0.0
        %1106 = vmatmul.mubr.f32.gmra.mrb[0].mxu0 %v744
        %v1107 = vpop.f32.mrb[0].mxu0
        %v1108 = vadd.f32 0.0, %v1107
        %v1109 = vpop.f32.mrb[0].mxu0
        %1110 = vmatprep.mubr.f32.mxu0 0.0
        %1111 = vmatmul.mubr.f32.gmra.mrb[0].mxu0 %v747
        %v1112 = vpop.f32.mrb[0].mxu0
        %v1113 = vadd.f32 0.0, %v1112
        %v1114 = vpop.f32.mrb[0].mxu0
        %1115 = vmatprep.mubr.f32.mxu0 0.0
        %1116 = vmatmul.mubr.f32.gmra.mrb[0].mxu0 %v750
        %v1117 = vpop.f32.mrb[0].mxu0
        %v1118 = vadd.f32 0.0, %v1117
        %v1119 = vpop.f32.mrb[0].mxu0
        %1120 = vmatprep.mubr.f32.mxu0 0.0
        %1121 = vmatmul.mubr.f32.gmra.mrb[0].mxu0 %v753
        %v1122 = vpop.f32.mrb[0].mxu0
        %v1123 = vadd.f32 0.0, %v1122
        %v1124 = vpop.f32.mrb[0].mxu0
        %1125 = vmatprep.mubr.f32.mxu0 0.0
        %1126 = vmatmul.mubr.f32.gmra.mrb[0].mxu0 %v756
        %v1127 = vpop.f32.mrb[0].mxu0
        %v1128 = vadd.f32 0.0, %v1127
        %v1129 = vpop.f32.mrb[0].mxu0
        %1130 = vmatprep.mubr.f32.mxu0 0.0
        %1131 = vmatmul.mubr.f32.gmra.mrb[0].mxu0 %v759
        %v1132 = vpop.f32.mrb[0].mxu0
        %v1133 = vadd.f32 0.0, %v1132
        %v1134 = vpop.f32.mrb[0].mxu0
        %1135 = vdwg.mxu0
        loop: start=0, step=1, limit=32
        $region85: #{forward.1} parent=59 // loop_pre_header
          _
        $region86: #{forward.1} parent=59 // loop_header
          %s1137 = sphi 0, %s1141
          %p1138 = scmp.ge.s32.totalorder %s1137, 32
          %v1142 = vphi 0.0, %v1288
        $region87: #{forward.1} parent=59 // loop_header_branch
          %1140 = sbr.rel (%p1138) target = $region91
        $region88: #{forward.1} parent=59 // loop_body
          %s1143 = sld [smem:[#allocation9 + %s1137]]
          %v1144 = vstv %s1143
          %v1145 = vmul.f32 %v828, %v1144
          %v1146 = vmul.f32 %v833, %v1144
          %v1147 = vmul.f32 %v838, %v1144
          %v1148 = vmul.f32 %v843, %v1144
          %s1149 = sshra.s32 %s1137, 7
          %s1150 = sand.u32 %s1137, 127
          %s1151 = sadd.s32 %s1149, 1
          %s1152 = smul.u32 %s1151, 128
          %s1153 = sshra.s32 %s1137, 7
          %s1154 = sand.u32 %s1137, 127
          %s1155 = sadd.s32 %s1152, %s1154
          %s1156 = sld [smem:[#allocation9 + %s1155]]
          %v1157 = vstv %s1156
          %v1158 = vmul.f32 %v848, %v1157
          %v1159 = vmul.f32 %v853, %v1157
          %v1160 = vmul.f32 %v858, %v1157
          %v1161 = vmul.f32 %v863, %v1157
          %v1162 = vadd.f32 %v1145, %v1158
          %v1163 = vadd.f32 %v1146, %v1159
          %v1164 = vadd.f32 %v1147, %v1160
          %v1165 = vadd.f32 %v1148, %v1161
          %s1166 = sadd.s32 %s1149, 2
          %s1167 = smul.u32 %s1166, 128
          %s1168 = sadd.s32 %s1167, %s1154
          %s1169 = sld [smem:[#allocation9 + %s1168]]
          %v1170 = vstv %s1169
          %v1171 = vmul.f32 %v868, %v1170
          %v1172 = vmul.f32 %v873, %v1170
          %v1173 = vmul.f32 %v878, %v1170
          %v1174 = vmul.f32 %v883, %v1170
          %v1175 = vadd.f32 %v1162, %v1171
          %v1176 = vadd.f32 %v1163, %v1172
          %v1177 = vadd.f32 %v1164, %v1173
          %v1178 = vadd.f32 %v1165, %v1174
          %s1179 = sadd.s32 %s1149, 3
          %s1180 = smul.u32 %s1179, 128
          %s1181 = sadd.s32 %s1180, %s1154
          %s1182 = sld [smem:[#allocation9 + %s1181]]
          %v1183 = vstv %s1182
          %v1184 = vmul.f32 %v953, %v1183
          %v1185 = vmul.f32 %v958, %v1183
          %v1186 = vmul.f32 %v963, %v1183
          %v1187 = vmul.f32 %v968, %v1183
          %v1188 = vadd.f32 %v1175, %v1184
          %v1189 = vadd.f32 %v1176, %v1185
          %v1190 = vadd.f32 %v1177, %v1186
          %v1191 = vadd.f32 %v1178, %v1187
          %s1192 = sadd.s32 %s1149, 4
          %s1193 = smul.u32 %s1192, 128
          %s1194 = sadd.s32 %s1193, %s1154
          %s1195 = sld [smem:[#allocation9 + %s1194]]
          %v1196 = vstv %s1195
          %v1197 = vmul.f32 %v973, %v1196
          %v1198 = vmul.f32 %v978, %v1196
          %v1199 = vmul.f32 %v983, %v1196
          %v1200 = vmul.f32 %v988, %v1196
          %v1201 = vadd.f32 %v1188, %v1197
          %v1202 = vadd.f32 %v1189, %v1198
          %v1203 = vadd.f32 %v1190, %v1199
          %v1204 = vadd.f32 %v1191, %v1200
          %s1205 = sadd.s32 %s1149, 5
          %s1206 = smul.u32 %s1205, 128
          %s1207 = sadd.s32 %s1206, %s1154
          %s1208 = sld [smem:[#allocation9 + %s1207]]
          %v1209 = vstv %s1208
          %v1210 = vmul.f32 %v993, %v1209
          %v1211 = vmul.f32 %v998, %v1209
          %v1212 = vmul.f32 %v1003, %v1209
          %v1213 = vmul.f32 %v1008, %v1209
          %v1214 = vadd.f32 %v1201, %v1210
          %v1215 = vadd.f32 %v1202, %v1211
          %v1216 = vadd.f32 %v1203, %v1212
          %v1217 = vadd.f32 %v1204, %v1213
          %s1218 = sadd.s32 %s1149, 6
          %s1219 = smul.u32 %s1218, 128
          %s1220 = sadd.s32 %s1219, %s1154
          %s1221 = sld [smem:[#allocation9 + %s1220]]
          %v1222 = vstv %s1221
          %v1223 = vmul.f32 %v1078, %v1222
          %v1224 = vmul.f32 %v1083, %v1222
          %v1225 = vmul.f32 %v1088, %v1222
          %v1226 = vmul.f32 %v1093, %v1222
          %v1227 = vadd.f32 %v1214, %v1223
          %v1228 = vadd.f32 %v1215, %v1224
          %v1229 = vadd.f32 %v1216, %v1225
          %v1230 = vadd.f32 %v1217, %v1226
          %s1231 = sadd.s32 %s1149, 7
          %s1232 = smul.u32 %s1231, 128
          %s1233 = sadd.s32 %s1232, %s1154
          %s1234 = sld [smem:[#allocation9 + %s1233]]
          %v1235 = vstv %s1234
          %v1236 = vmul.f32 %v1098, %v1235
          %v1237 = vmul.f32 %v1103, %v1235
          %v1238 = vmul.f32 %v1108, %v1235
          %v1239 = vmul.f32 %v1113, %v1235
          %v1240 = vadd.f32 %v1227, %v1236
          %v1241 = vadd.f32 %v1228, %v1237
          %v1242 = vadd.f32 %v1229, %v1238
          %v1243 = vadd.f32 %v1230, %v1239
          %s1244 = sadd.s32 %s1149, 8
          %s1245 = smul.u32 %s1244, 128
          %s1246 = sadd.s32 %s1245, %s1154
          %s1247 = sld [smem:[#allocation9 + %s1246]]
          %v1248 = vstv %s1247
          %v1249 = vmul.f32 %v1118, %v1248
          %v1250 = vmul.f32 %v1123, %v1248
          %v1251 = vmul.f32 %v1128, %v1248
          %v1252 = vmul.f32 %v1133, %v1248
          %v1253 = vadd.f32 %v1240, %v1249
          %v1254 = vadd.f32 %v1241, %v1250
          %v1255 = vadd.f32 %v1242, %v1251
          %v1256 = vadd.f32 %v1243, %v1252
          %s1257 = sld [smem:[#allocation10 + %s1137]]
          %v1258 = vstv %s1257
          %v1259 = vadd.f32 %v1253, %v1258
          %v1260 = vadd.f32 %v1254, %v1258
          %v1261 = vadd.f32 %v1255, %v1258
          %v1262 = vadd.f32 %v1256, %v1258
          %v1263 = vmax.f32 %v1259, 0.0
          %v1264 = vmax.f32 %v1260, 0.0
          %v1265 = vmax.f32 %v1261, 0.0
          %v1266 = vmax.f32 %v1262, 0.0
          %vm1267 = vcmask 31744
          %v1268 = vsel %vm1267, %v1263, 0.0
          %v1269 = vsel %vm1267, %v1264, 0.0
          %v1270 = vadd.f32 %v1268, %v1269
          %v1271 = vsel %vm1267, %v1265, 0.0
          %v1272 = vadd.f32 %v1270, %v1271
          %v1273 = vsel %vm1267, %v1266, 0.0
          %v1274 = vadd.f32 %v1272, %v1273
          %1275 = vadd.xlane.f32.xlu0 %v1274
          %v1276 = vpop.xlane.xlu0 %1275
          %v1277 = vrot.slane %v1276, 4
          %v1278 = vadd.f32 %v1276, %v1277
          %v1279 = vrot.slane %v1278, 2
          %v1280 = vadd.f32 %v1278, %v1279
          %v1281 = vrot.slane %v1280, 1
          %v1282 = vadd.f32 %v1280, %v1281
          %s1283 = vtos %v1282
          %s1284 = smul.f32 %s1283, 0.0078125
          %v1285 = vstv %s1137
          %vm1286 = vcmp.eq.s32.totalorder %v475, %v1285
          %v1287 = vstv %s1284
          %v1288 = vsel %vm1286, %v1287, %v1142
        $region89: #{forward.1} parent=59 // loop_footer
          %s1141 = sadd.s32 1, %s1137
        $region90: #{forward.1} parent=59 // loop_footer_branch
          %1136 = sbr.rel target = $region86
        $region91: #{forward.1} parent=59 // loop_exit
          _
        %v1289 = vld [vmem:[#allocation11] sm:$0xff]
        %v1290 = vld [vmem:[#allocation11 + $0x8] sm:$0xff]
        %v1291 = vld [vmem:[#allocation11 + $0x10] sm:$0xff]
        %v1292 = vld [vmem:[#allocation11 + $0x18] sm:$0xff]
        %v1293 = vld [vmem:[%s7] sm:$0x1]
        %vm1294 = vcmask 261120
        %v1296 = vsel %vm1294, %v1142, 0
        %1298 = vmatprep.subr.mxu0 0.0
        %1299 = vmatpush1.msra.mxu0 %v1289
        %1300 = vmatprep.subr.mxu0 0.0
        %1301 = vmatpush1.msra.mxu0 %v1290
        %1302 = vmatprep.subr.mxu0 0.0
        %1303 = vmatpush1.msra.mxu0 %v1291
        %1304 = vmatprep.subr.mxu0 0.0
        %1305 = vmatpush1.msra.mxu0 %v1292
        %1306 = vmatprep.subr.mxu0 0.0
        %1307 = vmatpush1.msra.mxu0 0.0
        %1308 = vmatprep.subr.mxu0 0.0
        %1309 = vmatpush1.msra.mxu0 0.0
        %1310 = vmatprep.subr.mxu0 0.0
        %1311 = vmatpush1.msra.mxu0 0.0
        %1312 = vmatprep.subr.mxu0 0.0
        %1313 = vmatpush1.msra.mxu0 0.0
        %1314 = vmatprep.subr.mxu0 0.0
        %1315 = vmatpush1.msra.mxu0 0.0
        %1316 = vmatprep.subr.mxu0 0.0
        %1317 = vmatpush1.msra.mxu0 0.0
        %1318 = vmatprep.subr.mxu0 0.0
        %1319 = vmatpush1.msra.mxu0 0.0
        %1320 = vmatprep.subr.mxu0 0.0
        %1321 = vmatpush1.msra.mxu0 0.0
        %1322 = vmatprep.subr.mxu0 0.0
        %1323 = vmatpush1.msra.mxu0 0.0
        %1324 = vmatprep.subr.mxu0 0.0
        %1325 = vmatpush1.msra.mxu0 0.0
        %1326 = vmatprep.subr.mxu0 0.0
        %1327 = vmatpush1.msra.mxu0 0.0
        %1328 = vmatprep.subr.mxu0 0.0
        %1329 = vmatpush1.msra.mxu0 0.0
        %1330 = vmatprep.subr.mxu0 0.0
        %1331 = vmatpush1.msra.mxu0 0.0
        %1332 = vmatprep.subr.mxu0 0.0
        %1333 = vmatpush1.msra.mxu0 0.0
        %1334 = vmatprep.subr.mxu0 0.0
        %1335 = vmatpush1.msra.mxu0 0.0
        %1336 = vmatprep.subr.mxu0 0.0
        %1337 = vmatpush1.msra.mxu0 0.0
        %1338 = vmatprep.subr.mxu0 0.0
        %1339 = vmatpush1.msra.mxu0 0.0
        %1340 = vmatprep.subr.mxu0 0.0
        %1341 = vmatpush1.msra.mxu0 0.0
        %1342 = vmatprep.subr.mxu0 0.0
        %1343 = vmatpush1.msra.mxu0 0.0
        %1344 = vmatprep.subr.mxu0 0.0
        %1345 = vmatpush1.msra.mxu0 0.0
        %1346 = vmatprep.subr.mxu0 0.0
        %1347 = vmatpush1.msra.mxu0 0.0
        %1348 = vmatprep.subr.mxu0 0.0
        %1349 = vmatpush1.msra.mxu0 0.0
        %1350 = vmatprep.subr.mxu0 0.0
        %1351 = vmatpush1.msra.mxu0 0.0
        %1352 = vmatprep.subr.mxu0 0.0
        %1353 = vmatpush1.msra.mxu0 0.0
        %1354 = vmatprep.subr.mxu0 0.0
        %1355 = vmatpush1.msra.mxu0 0.0
        %1356 = vmatprep.subr.mxu0 0.0
        %1357 = vmatpush1.msra.mxu0 0.0
        %1358 = vmatprep.subr.mxu0 0.0
        %1359 = vmatpush1.msra.mxu0 0.0
        %1360 = vmatprep.subr.mxu0 0.0
        %1361 = vmatpush1.msra.mxu0 0.0
        %1362 = vmatprep.mubr.f32.mxu0 0.0
        %1363 = vmatmul.mubr.f32.gmra.mrb[0].mxu0 %v1296
        %v1364 = vpop.f32.mrb[0].mxu0
        %v1365 = vadd.f32 %v1293, %v1364
        %v1366 = vpop.f32.mrb[0].mxu0
        %1367 = vdwg.mxu0
        %v1368 = vmax.f32 %v1365, 0.0
        %v1369 = vld [vmem:[%s8] sm:$0xff]
        %v1370 = vld [vmem:[%s8 + $0x8] sm:$0xff]
        %v1371 = vld [vmem:[%s8 + $0x10] sm:$0xff]
        %v1372 = vld [vmem:[%s8 + $0x18] sm:$0xff]
        %v1373 = vld [vmem:[%s8 + $0x20] sm:$0xff]
        %v1374 = vld [vmem:[%s8 + $0x28] sm:$0xff]
        %v1375 = vld [vmem:[%s9] sm:$0x1]
        %vm1376 = vcmask 392192
        %v1378 = vsel %vm1376, %v1368, 0
        %1380 = vmatprep.subr.mxu0 0.0
        %1381 = vmatpush1.msra.mxu0 %v1369
        %1382 = vmatprep.subr.mxu0 0.0
        %1383 = vmatpush1.msra.mxu0 %v1370
        %1384 = vmatprep.subr.mxu0 0.0
        %1385 = vmatpush1.msra.mxu0 %v1371
        %1386 = vmatprep.subr.mxu0 0.0
        %1387 = vmatpush1.msra.mxu0 %v1372
        %1388 = vmatprep.subr.mxu0 0.0
        %1389 = vmatpush1.msra.mxu0 %v1373
        %1390 = vmatprep.subr.mxu0 0.0
        %1391 = vmatpush1.msra.mxu0 %v1374
        %1392 = vmatprep.subr.mxu0 0.0
        %1393 = vmatpush1.msra.mxu0 0.0
        %1394 = vmatprep.subr.mxu0 0.0
        %1395 = vmatpush1.msra.mxu0 0.0
        %1396 = vmatprep.subr.mxu0 0.0
        %1397 = vmatpush1.msra.mxu0 0.0
        %1398 = vmatprep.subr.mxu0 0.0
        %1399 = vmatpush1.msra.mxu0 0.0
        %1400 = vmatprep.subr.mxu0 0.0
        %1401 = vmatpush1.msra.mxu0 0.0
        %1402 = vmatprep.subr.mxu0 0.0
        %1403 = vmatpush1.msra.mxu0 0.0
        %1404 = vmatprep.subr.mxu0 0.0
        %1405 = vmatpush1.msra.mxu0 0.0
        %1406 = vmatprep.subr.mxu0 0.0
        %1407 = vmatpush1.msra.mxu0 0.0
        %1408 = vmatprep.subr.mxu0 0.0
        %1409 = vmatpush1.msra.mxu0 0.0
        %1410 = vmatprep.subr.mxu0 0.0
        %1411 = vmatpush1.msra.mxu0 0.0
        %1412 = vmatprep.subr.mxu0 0.0
        %1413 = vmatpush1.msra.mxu0 0.0
        %1414 = vmatprep.subr.mxu0 0.0
        %1415 = vmatpush1.msra.mxu0 0.0
        %1416 = vmatprep.subr.mxu0 0.0
        %1417 = vmatpush1.msra.mxu0 0.0
        %1418 = vmatprep.subr.mxu0 0.0
        %1419 = vmatpush1.msra.mxu0 0.0
        %1420 = vmatprep.subr.mxu0 0.0
        %1421 = vmatpush1.msra.mxu0 0.0
        %1422 = vmatprep.subr.mxu0 0.0
        %1423 = vmatpush1.msra.mxu0 0.0
        %1424 = vmatprep.subr.mxu0 0.0
        %1425 = vmatpush1.msra.mxu0 0.0
        %1426 = vmatprep.subr.mxu0 0.0
        %1427 = vmatpush1.msra.mxu0 0.0
        %1428 = vmatprep.subr.mxu0 0.0
        %1429 = vmatpush1.msra.mxu0 0.0
        %1430 = vmatprep.subr.mxu0 0.0
        %1431 = vmatpush1.msra.mxu0 0.0
        %1432 = vmatprep.subr.mxu0 0.0
        %1433 = vmatpush1.msra.mxu0 0.0
        %1434 = vmatprep.subr.mxu0 0.0
        %1435 = vmatpush1.msra.mxu0 0.0
        %1436 = vmatprep.subr.mxu0 0.0
        %1437 = vmatpush1.msra.mxu0 0.0
        %1438 = vmatprep.subr.mxu0 0.0
        %1439 = vmatpush1.msra.mxu0 0.0
        %1440 = vmatprep.subr.mxu0 0.0
        %1441 = vmatpush1.msra.mxu0 0.0
        %1442 = vmatprep.subr.mxu0 0.0
        %1443 = vmatpush1.msra.mxu0 0.0
        %1444 = vmatprep.mubr.f32.mxu0 0.0
        %1445 = vmatmul.mubr.f32.gmra.mrb[0].mxu0 %v1378
        %v1446 = vpop.f32.mrb[0].mxu0
        %v1447 = vadd.f32 %v1375, %v1446
        %v1448 = vpop.f32.mrb[0].mxu0
        %1449 = vdwg.mxu0
        %1450 = vrot.lane.b32.xlu0 %v1368, 64
        %v1451 = vpop.permute.xlu0 %1450
        %1453 = vrot.lane.b32.xlu0 %v1142, 112
        %v1454 = vpop.permute.xlu0 %1453
        %1457 = vrot.lane.b32.xlu0 %v1447, 16
        %v1458 = vpop.permute.xlu0 %1457
        %v1460 = vsel %vm550, %v559, %v1451
        %vm1461 = vcmask 916480
        %v1462 = vsel %vm1461, %v1460, %v1454
        %vm1463 = vcmask 130048
        %v1464 = vsel %vm1463, %v1454, %v1458
        %vm1465 = vcmask 211968
        %v1466 = vsel %vm1465, %v1464, 0.0
        %v1469 = vcombine.low %v1462, %v1466
        %v1471 = vunpack.c.l.s4 1966171168
        %v1472 = vunpack.c.0.s8 %v1471
        %v1473 = vlaneseq
        %v1474 = vshrl.u32 %v1473, 7
        %v1475 = vsub.s32 %v1472, %v1474
        %v1476 = vrot.slane %v1469, %v1475
        %v1478 = vunpack.c.l.s4 1966171168
        %v1479 = vunpack.c.0.s8 %v1478
        %v1480 = vlaneseq
        %v1481 = vshrl.u32 %v1480, 7
        %v1482 = vsub.s32 %v1479, %v1481
        %v1483 = vrot.slane %v1476, %v1482
        %v1485 = vlaneseq
        %vm1486 = vcmp.ge.s32.totalorder %v1485, 0
        %vm1487 = vcmp.lt.s32.totalorder %v1485, 256
        %vm1488 = vmand %vm1486, %vm1487
        %1489 = vst.msk [vmem:[%s440] sm:$0x3] %vm1488, %v1483
        %p1490 = scmp.lt.s32.totalorder %s26, 1
        %s1491 = scalar_select %p1490, %s26, 1
        %s1492 = smul.addr %s1491, 2
        %s1493 = scalar_lea.vmem %s10, %s1492
        // Predicated region
        $region92: #{forward.1} parent=59 // pred_check
          %p1494 = pneg %p259
        $region93: #{forward.1} parent=59 // pred_check_branch
          %1496 = sbr.rel (%p1494) target = $region95
        $region94: #{forward.1} parent=59 // pred_region
          _
        $region95: #{forward.1} parent=59 // pred_fallthru
          _
      $region60: #{forward.1} parent=5 // pred_fallthru
        _
      %p1497 = scmp.le.s32.totalorder 2, %s21
      // Predicated region
      $region96: #{forward.1} parent=5 // pred_check
        %p1498 = pneg %p1497
      $region97: #{forward.1} parent=5 // pred_check_branch
        %1500 = sbr.rel (%p1498) target = $region99
      $region98: #{forward.1} parent=5 // pred_region
        %s1501 = ssub.s32 %s21, 2
        // Predicated region
        $region100: #{forward.1} parent=98 // pred_check
          %p1502 = pneg %p265
        $region101: #{forward.1} parent=98 // pred_check_branch
          %1504 = sbr.rel (%p1502) target = $region103
        $region102: #{forward.1} parent=98 // pred_region
          %p1505 = scmp.lt.s32.totalorder %s27, 1
          %s1506 = scalar_select %p1505, %s27, 1
          %s1507 = smul.addr %s1506, 2
          %s1508 = scalar_lea.vmem %s10, %s1507
        $region103: #{forward.1} parent=98 // pred_fallthru
          _
      $region99: #{forward.1} parent=5 // pred_fallthru
        _
    $region6: #{forward.1} parent=1 // loop_footer
      %s25 = sadd.s32 1, %s21
    $region7: #{forward.1} parent=1 // loop_footer_branch
      %20 = sbr.rel target = $region3
    $region8: #{forward.1} parent=1 // loop_exit
      _
    %1509 = vsyncpa [#allocation3], 1
    %s1510 = scalar_lea.sflag [#allocation3], 1
    %1511 = vsyncpa %s1510, 1
    %1512 = vsyncpa [#allocation7], 1
    %1513 = vsyncpa [#allocation12], 1
    %1514 = vsyncpa [#allocation4], 1
    %s1515 = scalar_lea.sflag [#allocation4], 1
    %1516 = vsyncpa %s1515, 1
    %1517 = vsyncpa [#allocation5], 1
    %s1518 = scalar_lea.sflag [#allocation5], 1
    %1519 = vsyncpa %s1518, 1

</llo_original>
